<compile_context>
chip_gen: v5e
topology: v5e:2x2
jax: 0.10.0
libtpu: 0.0.40
codegen_flags: <defaults>
</compile_context>

<pallas_src>
import math

import jax
import jax.numpy as jnp
import numpy as np
from jax.experimental import pallas as pl
from jax.experimental.pallas import tpu as pltpu


# ----------------------------- Pallas kernels ------------------------------ #

def _octave_conv_add_stats_kernel(xh_ref, xl_ref, wh_ref, wl_ref, sx_ref,
                                  y_ref, stats_ref):
    # xh_ref: (1, H+2,  W+2,  c_h) f32   halo-padded high-res activations
    # xl_ref: (1, HL+2, WL+2, c_l) f32   halo-padded low-res activations
    # wh_ref: (9*c_h, C_outp) bf16       flattened h2h conv weights (resident)
    # wl_ref: (9*c_l, C_outp) bf16       flattened l2h conv weights (resident)
    # sx_ref: (HL, W, WL) f32            tiny 0/1 width-upsample selector
    # y_ref : (1, H*W, C_outp) bf16      conv_h + upsample(conv_l) (pre-BN)
    # stats_ref: (1, 2, C_outp) f32      per-image [sum, sum-of-squares]
    xh = xh_ref[0]
    xl = xl_ref[0]
    h_hi, w_hi, c_hi = xh.shape[0] - 2, xh.shape[1] - 2, xh.shape[2]
    h_lo, w_lo, c_lo = xl.shape[0] - 2, xl.shape[1] - 2, xl.shape[2]
    c_outp = wh_ref.shape[1]

    def conv3x3(x, n_rows, n_cols, cin, w_flat_ref):
        # 3x3 / stride-1 / pad-1 conv as ONE MXU matmul.  Each tap is
        # reshaped while still f32 (layout-preserving: n_cols % 8 == 0) and
        # then cast, so the 9x-duplicated patch slab lives in VMEM as bf16
        # (half the footprint / store work of an f32 slab).
        taps = [x[ky:ky + n_rows, kx:kx + n_cols, :]
                .reshape(n_rows * n_cols, cin)
                .astype(jnp.bfloat16)
                for ky in range(3) for kx in range(3)]
        patches = jnp.concatenate(taps, axis=-1)              # (R, 9*cin) bf16
        return jnp.dot(patches, w_flat_ref[...],
                       preferred_element_type=jnp.float32)

    conv_h = conv3x3(xh, h_hi, w_hi, c_hi, wh_ref)            # (H*W,   Cp) f32
    conv_l = conv3x3(xl, h_lo, w_lo, c_lo, wl_ref)            # (HL*WL, Cp) f32

    # 2x nearest upsample of the low branch, fully in VMEM:
    #   width  (x): separable 0/1 selection einsum, HL batches of (W,WL)@(WL,C)
    #               (a few percent of the conv FLOPs, tiny operands),
    #   height (y): duplicate each W-row block via a sublane-tile-aligned
    #               concat + leading-dim collapse (layout-preserving).
    cl = conv_l.reshape(h_lo, w_lo, c_outp)                   # f32, no-op
    mid = jnp.einsum('hxw,hwc->hxc', sx_ref[...], cl,
                     preferred_element_type=jnp.float32)      # (HL, W, Cp)
    up = jnp.concatenate([mid, mid], axis=1)                  # (HL, 2W, Cp)
    up = up.reshape(h_hi * w_hi, c_outp)

    y = conv_h + up                                           # (H*W, Cp) f32

    # BN pass-1 statistics fused into the conv epilogue (f32, single pass).
    # TODO(synk): use a shifted/two-pass variance if post-conv activations can
    # be large-magnitude (E[x^2]-E[x]^2 cancellation).
    stats_ref[0] = jnp.concatenate(
        [jnp.sum(y, axis=0, keepdims=True),
         jnp.sum(y * y, axis=0, keepdims=True)], axis=0)

    # y crosses HBM twice (write here, read in kernel 2) -> store in bf16.
    y_ref[0] = y.astype(jnp.bfloat16)


def _bn_relu_nchw_kernel(y_ref, scale_ref, shift_ref, o_ref):
    # y_ref: (1, tcol, C_outp) bf16;  scale/shift: (1, C_outp) f32 resident.
    # o_ref: (1, C_out, tcol) f32  -- channel slice + transpose fused here so
    # the wrapper's final NCHW reshape is free (no extra HBM pass).
    c_out = o_ref.shape[1]
    y = y_ref[0].astype(jnp.float32)                          # (tcol, Cp)
    z = jnp.maximum(y * scale_ref[...] + shift_ref[...], 0.0)
    o_ref[0] = jnp.transpose(z)[:c_out, :]                    # (C_out, tcol)


# ------------------------------- wrapper ------------------------------------ #

def _largest_lane_tile(total, max_tile=2048):
    """Largest divisor of `total` that is a multiple of 128 and <= max_tile."""
    best = 0
    t = 128
    while t <= min(total, max_tile):
        if total % t == 0:
            best = t
        t += 128
    return best if best else total


def last_octave_cbr(x_h, x_l, w_h2h, w_l2h, gamma, beta, eps=1e-5):
    """Forward of LastOCtaveCBR (3x3 convs, stride=1, padding=1, bias=False).

    x_h: (N, C_h, H, W) NCHW, x_l: (N, C_l, H/2, W/2) NCHW
    w_h2h: (3, 3, C_h, C_out), w_l2h: (3, 3, C_l, C_out)   (kh, kw, in, out)
    gamma, beta: (C_out,) BatchNorm affine.  Returns NCHW (N, C_out, H, W).
    """
    n, c_h, H, W = x_h.shape
    _, c_l, HL, WL = x_l.shape
    c_out = w_h2h.shape[-1]
    c_outp = ((c_out + 127) // 128) * 128          # lane-dense channel padding
    # TODO(synk): when C_out << 128 (demo), pack several images/row-tiles per
    # grid step so the 128 output lanes are mostly useful work, not padding.

    # NCHW -> NHWC + halo pad of 1 (small; replaces any im2col slab in HBM).
    # TODO(synk): accept NHWC (and/or bf16) activations, or handle the 1-pixel
    # halo in-kernel via memory_space=pl.ANY + masked edge taps, to remove
    # this wrapper-side activation pass entirely.
    xh_p = jnp.pad(jnp.transpose(x_h, (0, 2, 3, 1)).astype(jnp.float32),
                   ((0, 0), (1, 1), (1, 1), (0, 0)))
    xl_p = jnp.pad(jnp.transpose(x_l, (0, 2, 3, 1)).astype(jnp.float32),
                   ((0, 0), (1, 1), (1, 1), (0, 0)))

    # (kh, kw, cin, cout) -> (9*cin, c_outp), zero-pad cout to 128, bf16 for MXU.
    def prep_w(w, cin):
        wf = w.reshape(9 * cin, c_out)
        wf = jnp.pad(wf, ((0, 0), (0, c_outp - c_out)))
        return wf.astype(jnp.bfloat16)
    wh_b = prep_w(w_h2h, c_h)
    wl_b = prep_w(w_l2h, c_l)

    # Tiny width-upsample 0/1 selector, pre-broadcast over HL (host-side, KBs).
    sx_np = np.zeros((W, WL), np.float32)
    sx_np[np.arange(W), np.arange(W) // 2] = 1.0
    sx = jnp.asarray(np.broadcast_to(sx_np, (HL, W, WL)).copy())

    cparams1 = pltpu.CompilerParams(
        dimension_semantics=("parallel",),
        vmem_limit_bytes=32 * 1024 * 1024)

    # ---- Kernel 1: conv_h + upsample(conv_l) + BN pass-1 stats ------------- #
    # TODO(synk): for production spatial sizes add a halo'd H row-tile grid
    # axis (keeps per-step VMEM under v7x's 64 MiB and gives each TensorCore
    # enough steps to pipeline when N is small).
    y, stats = pl.pallas_call(
        _octave_conv_add_stats_kernel,
        grid=(n,),
        in_specs=(
            pl.BlockSpec((1, H + 2, W + 2, c_h), lambda b: (b, 0, 0, 0)),
            pl.BlockSpec((1, HL + 2, WL + 2, c_l), lambda b: (b, 0, 0, 0)),
            pl.BlockSpec((9 * c_h, c_outp), lambda b: (0, 0)),
            pl.BlockSpec((9 * c_l, c_outp), lambda b: (0, 0)),
            pl.BlockSpec((HL, W, WL), lambda b: (0, 0, 0)),
        ),
        out_specs=(
            pl.BlockSpec((1, H * W, c_outp), lambda b: (b, 0, 0)),
            pl.BlockSpec((1, 2, c_outp), lambda b: (b, 0, 0)),
        ),
        out_shape=(
            jax.ShapeDtypeStruct((n, H * W, c_outp), jnp.bfloat16),
            jax.ShapeDtypeStruct((n, 2, c_outp), jnp.float32),
        ),
        compiler_params=cparams1,
    )(xh_p, xl_p, wh_b, wl_b, sx)

    # ---- Finalise BN statistics (tiny C-length computation) ---------------- #
    count = n * H * W
    tot = jnp.sum(stats, axis=0)                       # (2, c_outp)
    mean = tot[0] / count
    var = jnp.maximum(tot[1] / count - mean * mean, 0.0)   # biased batch var
    gamma_p = jnp.pad(gamma.astype(jnp.float32), (0, c_outp - c_out))
    beta_p = jnp.pad(beta.astype(jnp.float32), (0, c_outp - c_out))
    scale_v = gamma_p * jax.lax.rsqrt(var + eps)
    shift_v = beta_p - mean * scale_v
    scale = scale_v.reshape(1, c_outp)
    shift = shift_v.reshape(1, c_outp)

    # ---- Kernel 2: streaming BN + ReLU, fused slice + NCHW transpose ------- #
    hw = H * W
    tcol = _largest_lane_tile(hw)                      # large lane-dense tiles
    cparams2 = pltpu.CompilerParams(
        dimension_semantics=("parallel", "parallel"),
        vmem_limit_bytes=32 * 1024 * 1024)
    out_nc = pl.pallas_call(
        _bn_relu_nchw_kernel,
        grid=(n, hw // tcol),
        in_specs=(
            pl.BlockSpec((1, tcol, c_outp), lambda b, j: (b, j, 0)),
            pl.BlockSpec((1, c_outp), lambda b, j: (0, 0)),
            pl.BlockSpec((1, c_outp), lambda b, j: (0, 0)),
        ),
        out_specs=pl.BlockSpec((1, c_out, tcol), lambda b, j: (b, 0, j)),
        out_shape=jax.ShapeDtypeStruct((n, c_out, hw), jnp.float32),
        compiler_params=cparams2,
    )(y, scale, shift)

    return out_nc.reshape(n, c_out, H, W)              # contiguous: free NCHW


# ----------------------------- reference (jnp) ------------------------------ #

def _reference(x_h, x_l, w_h2h, w_l2h, gamma, beta):
    def conv(x_nchw, w_khwio):
        w_oihw = jnp.transpose(w_khwio, (3, 2, 0, 1))
        return jax.lax.conv_general_dilated(
            x_nchw, w_oihw, window_strides=(1, 1),
            padding=((1, 1), (1, 1)),
            dimension_numbers=("NCHW", "OIHW", "NCHW"))
    yh = conv(x_h, w_h2h)
    yl = conv(x_l, w_l2h)
    up = jnp.repeat(jnp.repeat(yl, 2, axis=2), 2, axis=3)
    y = yh + up
    mean = jnp.mean(y, axis=(0, 2, 3), keepdims=True)
    var = jnp.mean((y - mean) ** 2, axis=(0, 2, 3), keepdims=True)
    yn = (y - mean) * jax.lax.rsqrt(var + 1e-5)
    yn = yn * gamma.reshape(1, -1, 1, 1) + beta.reshape(1, -1, 1, 1)
    return jnp.maximum(yn, 0.0)


# ---------------------------------- main ------------------------------------ #

if __name__ == "__main__":
    key = jax.random.PRNGKey(0)
    N, in_ch, out_ch, H, W = 2, 8, 8, 16, 16
    alpha = 0.5
    c_l = int(alpha * in_ch)          # low-frequency channels
    c_h = in_ch - c_l                 # high-frequency channels

    k1, k2, k3, k4, k5, k6 = jax.random.split(key, 6)
    x_h = jax.random.normal(k1, (N, c_h, H, W), jnp.float32)
    x_l = jax.random.normal(k2, (N, c_l, H // 2, W // 2), jnp.float32)

    w_h2h = jax.random.normal(k3, (3, 3, c_h, out_ch), jnp.float32) / math.sqrt(9 * c_h)
    w_l2h = jax.random.normal(k4, (3, 3, c_l, out_ch), jnp.float32) / math.sqrt(9 * c_l)
    gamma = 1.0 + 0.1 * jax.random.normal(k5, (out_ch,), jnp.float32)
    beta = 0.1 * jax.random.normal(k6, (out_ch,), jnp.float32)

    out = last_octave_cbr(x_h, x_l, w_h2h, w_l2h, gamma, beta)
    out = jax.block_until_ready(out)

    ref = jax.block_until_ready(_reference(x_h, x_l, w_h2h, w_l2h, gamma, beta))
    # Tolerance accounts for bf16 MXU inputs + bf16 pre-BN intermediate
    # (BN statistics and accumulation stay f32) vs the f32 reference.
    np.testing.assert_allclose(np.asarray(out), np.asarray(ref),
                               rtol=3e-2, atol=3e-2)

    print("KERNEL_OK")
</pallas_src>

<mosaic_0001>
module attributes {stable_mosaic.version = 11 : i64} {
  func.func @_octave_conv_add_stats_kernel(%arg0: i32, %arg1: memref<1x18x18x4xf32, #tpu.memory_space<vmem>>, %arg2: memref<1x10x10x4xf32, #tpu.memory_space<vmem>>, %arg3: memref<36x128xbf16, #tpu.memory_space<vmem>>, %arg4: memref<36x128xbf16, #tpu.memory_space<vmem>>, %arg5: memref<8x16x8xf32, #tpu.memory_space<vmem>>, %arg6: memref<1x256x128xbf16, #tpu.memory_space<vmem>>, %arg7: memref<1x2x128xf32, #tpu.memory_space<vmem>>) attributes {dimension_semantics = [#tpu.dimension_semantics<parallel>], iteration_bounds = array<i64: 2>, scalar_prefetch = 0 : i64, scratch_operands = 0 : i64, tpu.core_type = #tpu.core_type<tc>, window_params = [{transform_indices = @transform_0, window_bounds = array<i64: 1, 18, 18, 4>}, {transform_indices = @transform_1, window_bounds = array<i64: 1, 10, 10, 4>}, {pipeline_mode = #tpu.pipeline_mode<synchronous>, transform_indices = @transform_2, window_bounds = array<i64: 36, 128>}, {pipeline_mode = #tpu.pipeline_mode<synchronous>, transform_indices = @transform_3, window_bounds = array<i64: 36, 128>}, {pipeline_mode = #tpu.pipeline_mode<synchronous>, transform_indices = @transform_4, window_bounds = array<i64: 8, 16, 8>}, {transform_indices = @transform_5, window_bounds = array<i64: 1, 256, 128>}, {transform_indices = @transform_6, window_bounds = array<i64: 1, 2, 128>}]} {
    %c0 = arith.constant 0 : index
    %c0_0 = arith.constant 0 : index
    %c0_1 = arith.constant 0 : index
    %c0_2 = arith.constant 0 : index
    %0 = vector.load %arg1[%c0, %c0_0, %c0_1, %c0_2] : memref<1x18x18x4xf32, #tpu.memory_space<vmem>>, vector<1x18x18x4xf32>
    %1 = vector.shape_cast %0 : vector<1x18x18x4xf32> to vector<18x18x4xf32>
    %c0_3 = arith.constant 0 : index
    %c0_4 = arith.constant 0 : index
    %c0_5 = arith.constant 0 : index
    %c0_6 = arith.constant 0 : index
    %2 = vector.load %arg2[%c0_3, %c0_4, %c0_5, %c0_6] : memref<1x10x10x4xf32, #tpu.memory_space<vmem>>, vector<1x10x10x4xf32>
    %3 = vector.shape_cast %2 : vector<1x10x10x4xf32> to vector<10x10x4xf32>
    %4 = vector.extract_strided_slice %1 {offsets = [0, 0, 0], sizes = [16, 16, 4], strides = [1, 1, 1]} : vector<18x18x4xf32> to vector<16x16x4xf32>
    %5 = vector.shape_cast %4 : vector<16x16x4xf32> to vector<256x4xf32>
    %6 = arith.truncf %5 : vector<256x4xf32> to vector<256x4xbf16>
    %7 = vector.extract_strided_slice %1 {offsets = [0, 1, 0], sizes = [16, 16, 4], strides = [1, 1, 1]} : vector<18x18x4xf32> to vector<16x16x4xf32>
    %8 = vector.shape_cast %7 : vector<16x16x4xf32> to vector<256x4xf32>
    %9 = arith.truncf %8 : vector<256x4xf32> to vector<256x4xbf16>
    %10 = vector.extract_strided_slice %1 {offsets = [0, 2, 0], sizes = [16, 16, 4], strides = [1, 1, 1]} : vector<18x18x4xf32> to vector<16x16x4xf32>
    %11 = vector.shape_cast %10 : vector<16x16x4xf32> to vector<256x4xf32>
    %12 = arith.truncf %11 : vector<256x4xf32> to vector<256x4xbf16>
    %13 = vector.extract_strided_slice %1 {offsets = [1, 0, 0], sizes = [16, 16, 4], strides = [1, 1, 1]} : vector<18x18x4xf32> to vector<16x16x4xf32>
    %14 = vector.shape_cast %13 : vector<16x16x4xf32> to vector<256x4xf32>
    %15 = arith.truncf %14 : vector<256x4xf32> to vector<256x4xbf16>
    %16 = vector.extract_strided_slice %1 {offsets = [1, 1, 0], sizes = [16, 16, 4], strides = [1, 1, 1]} : vector<18x18x4xf32> to vector<16x16x4xf32>
    %17 = vector.shape_cast %16 : vector<16x16x4xf32> to vector<256x4xf32>
    %18 = arith.truncf %17 : vector<256x4xf32> to vector<256x4xbf16>
    %19 = vector.extract_strided_slice %1 {offsets = [1, 2, 0], sizes = [16, 16, 4], strides = [1, 1, 1]} : vector<18x18x4xf32> to vector<16x16x4xf32>
    %20 = vector.shape_cast %19 : vector<16x16x4xf32> to vector<256x4xf32>
    %21 = arith.truncf %20 : vector<256x4xf32> to vector<256x4xbf16>
    %22 = vector.extract_strided_slice %1 {offsets = [2, 0, 0], sizes = [16, 16, 4], strides = [1, 1, 1]} : vector<18x18x4xf32> to vector<16x16x4xf32>
    %23 = vector.shape_cast %22 : vector<16x16x4xf32> to vector<256x4xf32>
    %24 = arith.truncf %23 : vector<256x4xf32> to vector<256x4xbf16>
    %25 = vector.extract_strided_slice %1 {offsets = [2, 1, 0], sizes = [16, 16, 4], strides = [1, 1, 1]} : vector<18x18x4xf32> to vector<16x16x4xf32>
    %26 = vector.shape_cast %25 : vector<16x16x4xf32> to vector<256x4xf32>
    %27 = arith.truncf %26 : vector<256x4xf32> to vector<256x4xbf16>
    %28 = vector.extract_strided_slice %1 {offsets = [2, 2, 0], sizes = [16, 16, 4], strides = [1, 1, 1]} : vector<18x18x4xf32> to vector<16x16x4xf32>
    %29 = vector.shape_cast %28 : vector<16x16x4xf32> to vector<256x4xf32>
    %30 = arith.truncf %29 : vector<256x4xf32> to vector<256x4xbf16>
    %31 = tpu.concatenate %6, %9, %12, %15, %18, %21, %24, %27, %30 in 1 : vector<256x4xbf16>, vector<256x4xbf16>, vector<256x4xbf16>, vector<256x4xbf16>, vector<256x4xbf16>, vector<256x4xbf16>, vector<256x4xbf16>, vector<256x4xbf16>, vector<256x4xbf16> -> vector<256x36xbf16>
    %c0_7 = arith.constant 0 : index
    %c0_8 = arith.constant 0 : index
    %32 = vector.load %arg3[%c0_7, %c0_8] : memref<36x128xbf16, #tpu.memory_space<vmem>>, vector<36x128xbf16>
    %cst = arith.constant dense<0.000000e+00> : vector<256x128xf32>
    %33 = tpu.matmul %31, %32, %cst {dimension_numbers = #tpu.dot_dimension_numbers<[1], [0], [0], [1], [0, 0, 1, 1], [], []>} : vector<256x36xbf16>, vector<36x128xbf16>, vector<256x128xf32> -> vector<256x128xf32>
    %34 = vector.extract_strided_slice %3 {offsets = [0, 0, 0], sizes = [8, 8, 4], strides = [1, 1, 1]} : vector<10x10x4xf32> to vector<8x8x4xf32>
    %35 = vector.shape_cast %34 : vector<8x8x4xf32> to vector<64x4xf32>
    %36 = arith.truncf %35 : vector<64x4xf32> to vector<64x4xbf16>
    %37 = vector.extract_strided_slice %3 {offsets = [0, 1, 0], sizes = [8, 8, 4], strides = [1, 1, 1]} : vector<10x10x4xf32> to vector<8x8x4xf32>
    %38 = vector.shape_cast %37 : vector<8x8x4xf32> to vector<64x4xf32>
    %39 = arith.truncf %38 : vector<64x4xf32> to vector<64x4xbf16>
    %40 = vector.extract_strided_slice %3 {offsets = [0, 2, 0], sizes = [8, 8, 4], strides = [1, 1, 1]} : vector<10x10x4xf32> to vector<8x8x4xf32>
    %41 = vector.shape_cast %40 : vector<8x8x4xf32> to vector<64x4xf32>
    %42 = arith.truncf %41 : vector<64x4xf32> to vector<64x4xbf16>
    %43 = vector.extract_strided_slice %3 {offsets = [1, 0, 0], sizes = [8, 8, 4], strides = [1, 1, 1]} : vector<10x10x4xf32> to vector<8x8x4xf32>
    %44 = vector.shape_cast %43 : vector<8x8x4xf32> to vector<64x4xf32>
    %45 = arith.truncf %44 : vector<64x4xf32> to vector<64x4xbf16>
    %46 = vector.extract_strided_slice %3 {offsets = [1, 1, 0], sizes = [8, 8, 4], strides = [1, 1, 1]} : vector<10x10x4xf32> to vector<8x8x4xf32>
    %47 = vector.shape_cast %46 : vector<8x8x4xf32> to vector<64x4xf32>
    %48 = arith.truncf %47 : vector<64x4xf32> to vector<64x4xbf16>
    %49 = vector.extract_strided_slice %3 {offsets = [1, 2, 0], sizes = [8, 8, 4], strides = [1, 1, 1]} : vector<10x10x4xf32> to vector<8x8x4xf32>
    %50 = vector.shape_cast %49 : vector<8x8x4xf32> to vector<64x4xf32>
    %51 = arith.truncf %50 : vector<64x4xf32> to vector<64x4xbf16>
    %52 = vector.extract_strided_slice %3 {offsets = [2, 0, 0], sizes = [8, 8, 4], strides = [1, 1, 1]} : vector<10x10x4xf32> to vector<8x8x4xf32>
    %53 = vector.shape_cast %52 : vector<8x8x4xf32> to vector<64x4xf32>
    %54 = arith.truncf %53 : vector<64x4xf32> to vector<64x4xbf16>
    %55 = vector.extract_strided_slice %3 {offsets = [2, 1, 0], sizes = [8, 8, 4], strides = [1, 1, 1]} : vector<10x10x4xf32> to vector<8x8x4xf32>
    %56 = vector.shape_cast %55 : vector<8x8x4xf32> to vector<64x4xf32>
    %57 = arith.truncf %56 : vector<64x4xf32> to vector<64x4xbf16>
    %58 = vector.extract_strided_slice %3 {offsets = [2, 2, 0], sizes = [8, 8, 4], strides = [1, 1, 1]} : vector<10x10x4xf32> to vector<8x8x4xf32>
    %59 = vector.shape_cast %58 : vector<8x8x4xf32> to vector<64x4xf32>
    %60 = arith.truncf %59 : vector<64x4xf32> to vector<64x4xbf16>
    %61 = tpu.concatenate %36, %39, %42, %45, %48, %51, %54, %57, %60 in 1 : vector<64x4xbf16>, vector<64x4xbf16>, vector<64x4xbf16>, vector<64x4xbf16>, vector<64x4xbf16>, vector<64x4xbf16>, vector<64x4xbf16>, vector<64x4xbf16>, vector<64x4xbf16> -> vector<64x36xbf16>
    %c0_9 = arith.constant 0 : index
    %c0_10 = arith.constant 0 : index
    %62 = vector.load %arg4[%c0_9, %c0_10] : memref<36x128xbf16, #tpu.memory_space<vmem>>, vector<36x128xbf16>
    %cst_11 = arith.constant dense<0.000000e+00> : vector<64x128xf32>
    %63 = tpu.matmul %61, %62, %cst_11 {dimension_numbers = #tpu.dot_dimension_numbers<[1], [0], [0], [1], [0, 0, 1, 1], [], []>} : vector<64x36xbf16>, vector<36x128xbf16>, vector<64x128xf32> -> vector<64x128xf32>
    %64 = vector.shape_cast %63 : vector<64x128xf32> to vector<8x8x128xf32>
    %c0_12 = arith.constant 0 : index
    %c0_13 = arith.constant 0 : index
    %c0_14 = arith.constant 0 : index
    %65 = vector.load %arg5[%c0_12, %c0_13, %c0_14] : memref<8x16x8xf32, #tpu.memory_space<vmem>>, vector<8x16x8xf32>
    "tpu.trace_start"() <{level = 10 : i32, message = "hxw,hwc->hxc"}> : () -> ()
    %cst_15 = arith.constant dense<0.000000e+00> : vector<8x16x128xf32>
    %66 = tpu.matmul %65, %64, %cst_15 {dimension_numbers = #tpu.dot_dimension_numbers<[2], [1], [1], [2], [0, 0, 0, 1, 1, 2], [0], [0]>} : vector<8x16x8xf32>, vector<8x8x128xf32>, vector<8x16x128xf32> -> vector<8x16x128xf32>
    "tpu.trace_stop"() : () -> ()
    %67 = tpu.concatenate %66, %66 in 1 : vector<8x16x128xf32>, vector<8x16x128xf32> -> vector<8x32x128xf32>
    %68 = vector.shape_cast %67 : vector<8x32x128xf32> to vector<256x128xf32>
    %69 = arith.addf %33, %68 : vector<256x128xf32>
    %cst_16 = arith.constant dense<0.000000e+00> : vector<128xf32>
    %70 = vector.multi_reduction <add>, %69, %cst_16 [0] : vector<256x128xf32> to vector<128xf32>
    %71 = vector.shape_cast %70 : vector<128xf32> to vector<1x128xf32>
    %72 = arith.mulf %69, %69 : vector<256x128xf32>
    %cst_17 = arith.constant dense<0.000000e+00> : vector<128xf32>
    %73 = vector.multi_reduction <add>, %72, %cst_17 [0] : vector<256x128xf32> to vector<128xf32>
    %74 = vector.shape_cast %73 : vector<128xf32> to vector<1x128xf32>
    %75 = tpu.concatenate %71, %74 in 0 : vector<1x128xf32>, vector<1x128xf32> -> vector<2x128xf32>
    %c0_18 = arith.constant 0 : index
    %c0_19 = arith.constant 0 : index
    %c0_20 = arith.constant 0 : index
    %76 = vector.load %arg7[%c0_18, %c0_19, %c0_20] : memref<1x2x128xf32, #tpu.memory_space<vmem>>, vector<1x2x128xf32>
    %77 = vector.shape_cast %76 : vector<1x2x128xf32> to vector<2x128xf32>
    %78 = vector.shape_cast %75 : vector<2x128xf32> to vector<1x2x128xf32>
    tpu.vector_store %arg7[%c0_18, %c0_19, %c0_20], %78 {strides = array<i32>} : memref<1x2x128xf32, #tpu.memory_space<vmem>>, vector<1x2x128xf32>,
    %79 = arith.truncf %69 : vector<256x128xf32> to vector<256x128xbf16>
    %c0_21 = arith.constant 0 : index
    %c0_22 = arith.constant 0 : index
    %c0_23 = arith.constant 0 : index
    %80 = vector.load %arg6[%c0_21, %c0_22, %c0_23] : memref<1x256x128xbf16, #tpu.memory_space<vmem>>, vector<1x256x128xbf16>
    %81 = vector.shape_cast %80 : vector<1x256x128xbf16> to vector<256x128xbf16>
    %82 = vector.shape_cast %79 : vector<256x128xbf16> to vector<1x256x128xbf16>
    tpu.vector_store %arg6[%c0_21, %c0_22, %c0_23], %82 {strides = array<i32>} : memref<1x256x128xbf16, #tpu.memory_space<vmem>>, vector<1x256x128xbf16>,
    return
  }
  func.func @transform_0(%arg0: i32) -> (i32, i32, i32, i32) {
    %c0_i32 = arith.constant 0 : i32
    %c0_i32_0 = arith.constant 0 : i32
    %c0_i32_1 = arith.constant 0 : i32
    %c0_i32_2 = arith.constant 0 : i32
    return %arg0, %c0_i32, %c0_i32_0, %c0_i32_1 : i32, i32, i32, i32
  }
  func.func @transform_1(%arg0: i32) -> (i32, i32, i32, i32) {
    %c0_i32 = arith.constant 0 : i32
    %c0_i32_0 = arith.constant 0 : i32
    %c0_i32_1 = arith.constant 0 : i32
    %c0_i32_2 = arith.constant 0 : i32
    return %arg0, %c0_i32, %c0_i32_0, %c0_i32_1 : i32, i32, i32, i32
  }
  func.func @transform_2(%arg0: i32) -> (i32, i32) {
    %c0_i32 = arith.constant 0 : i32
    %c0_i32_0 = arith.constant 0 : i32
    %c0_i32_1 = arith.constant 0 : i32
    return %c0_i32, %c0_i32_0 : i32, i32
  }
  func.func @transform_3(%arg0: i32) -> (i32, i32) {
    %c0_i32 = arith.constant 0 : i32
    %c0_i32_0 = arith.constant 0 : i32
    %c0_i32_1 = arith.constant 0 : i32
    return %c0_i32, %c0_i32_0 : i32, i32
  }
  func.func @transform_4(%arg0: i32) -> (i32, i32, i32) {
    %c0_i32 = arith.constant 0 : i32
    %c0_i32_0 = arith.constant 0 : i32
    %c0_i32_1 = arith.constant 0 : i32
    %c0_i32_2 = arith.constant 0 : i32
    return %c0_i32, %c0_i32_0, %c0_i32_1 : i32, i32, i32
  }
  func.func @transform_5(%arg0: i32) -> (i32, i32, i32) {
    %c0_i32 = arith.constant 0 : i32
    %c0_i32_0 = arith.constant 0 : i32
    %c0_i32_1 = arith.constant 0 : i32
    return %arg0, %c0_i32, %c0_i32_0 : i32, i32, i32
  }
  func.func @transform_6(%arg0: i32) -> (i32, i32, i32) {
    %c0_i32 = arith.constant 0 : i32
    %c0_i32_0 = arith.constant 0 : i32
    %c0_i32_1 = arith.constant 0 : i32
    return %arg0, %c0_i32, %c0_i32_0 : i32, i32, i32
  }
}

</mosaic_0001>

<llo_original>
// kernel: tpu_custom_call.1
$region0: #{tpu_custom_call.1}
  #allocation0 [shape = 'u32[]', space=smem, size = 0x4, offset = 0x4, fixed_abs, tag = 'smem constant byte address 0x4 - core index']
  #allocation1 [shape = 'u32[72,128]{1,0:T(1,128)}', space=vmem, size = 0x9000, scoped, tag = 'internal scratch']
  %s0 = inlined_call_operand.vmem [shape: f32[2,18,18,4], index: 0, kind: input, shape index: {}]
  %s1 = inlined_call_operand.vmem [shape: f32[2,10,10,4], index: 1, kind: input, shape index: {}]
  %s2 = inlined_call_operand.vmem [shape: bf16[36,128], index: 2, kind: input, shape index: {}]
  %s3 = inlined_call_operand.vmem [shape: bf16[36,128], index: 3, kind: input, shape index: {}]
  %s4 = inlined_call_operand.vmem [shape: f32[8,16,8], index: 4, kind: input, shape index: {}]
  %s5 = inlined_call_operand.hbm [shape: bf16[2,256,128], index: 5, kind: output, shape index: {0}]
  %s6 = inlined_call_operand.hbm [shape: f32[2,2,128], index: 6, kind: output, shape index: {1}]
  %7 = xla_tuple %s5, %s6
  %s8 = sld [smem:[#allocation0]]
  $region61: #{tpu_custom_call.1} parent=0
    _
  %s10 = ssub.s32 1, %s8
  %s11 = scalar_select 0, %s10, %s8
  $region1: #{tpu_custom_call.1} parent=0
    #allocation2 [shape = 'u8[131072]{0}', space=vmem, size = 0x20000, scoped, tag = 'output window, operand 0']
    #allocation3 [shape = 's32[2]{0}', space=sflag, size = 0x8, scoped, tag = 'scoped memory for tpu_custom_call.1']
    #allocation4 [shape = 'u8[2048]{0}', space=vmem, size = 0x800, scoped, tag = 'output window, operand 1']
    #allocation5 [shape = 's32[2]{0}', space=sflag, size = 0x8, scoped, tag = 'scoped memory for tpu_custom_call.1']
    %12 = vsyncpa [#allocation3], 0
    %s13 = scalar_lea.sflag [#allocation3], 1
    %14 = vsyncpa %s13, 0
    %15 = vsyncpa [#allocation5], 0
    %s16 = scalar_lea.sflag [#allocation5], 1
    %17 = vsyncpa %s16, 0
    loop: start=0, step=1, limit=4
    $region2: #{tpu_custom_call.1} parent=1 // loop_pre_header
      _
    $region3: #{tpu_custom_call.1} parent=1 // loop_header
      %s19 = sphi 0, %s23
      %p20 = scmp.ge.s32.totalorder %s19, 4
      %s29 = sphi 0, %s31
      %s32 = sphi 0, %s29
      %s33 = sphi 0, %s32
      %s49 = sphi 0, %s33
      %s55 = sphi 0, %s57
      %s58 = sphi 0, %s55
      %s59 = sphi 0, %s58
      %s75 = sphi 0, %s59
      %s79 = sphi 0, %s79
      %s81 = sphi 0, %s79
      %s82 = sphi 0, %s81
      %s96 = sphi 0, %s82
      %s100 = sphi 0, %s100
      %s102 = sphi 0, %s100
      %s103 = sphi 0, %s102
      %s117 = sphi 0, %s103
      %s121 = sphi 0, %s121
      %s123 = sphi 0, %s121
      %s124 = sphi 0, %s123
      %s138 = sphi 0, %s124
      %s144 = sphi 0, %s146
      %s147 = sphi 0, %s144
      %s148 = sphi 0, %s147
      %s164 = sphi 0, %s148
      %s170 = sphi 0, %s172
      %s173 = sphi 0, %s170
      %s174 = sphi 0, %s173
      %s190 = sphi 0, %s174
    $region4: #{tpu_custom_call.1} parent=1 // loop_header_branch
      %22 = sbr.rel (%p20) target = $region8
    $region5: #{tpu_custom_call.1} parent=1 // loop_body
      %s24 = ssub.s32 %s19, 1
      %s25 = ssub.s32 %s19, 2
      %s26 = sadd.s32 %s19, 1
      %s27 = ssub.s32 %s19, %s26
      %p28 = scmp.eq.s32.totalorder %s27, 0
      %s30 = sadd.s32 %s29, 1
      %s31 = scalar_select %p28, %s29, %s30
      %p34 = pneg %p28
      %p35 = scmp.eq.s32.totalorder %s19, 1
      %p36 = por %p34, %p35
      %p37 = scmp.ne.s32.totalorder %s29, %s32
      %p38 = scmp.eq.s32.totalorder %s19, 0
      %p39 = por %p37, %p38
      %p40 = scmp.ne.s32.totalorder %s29, %s32
      %p41 = scmp.eq.s32.totalorder %s24, 1
      %p42 = por %p40, %p41
      %p43 = scmp.ne.s32.totalorder %s32, %s33
      %p44 = scmp.eq.s32.totalorder %s24, 0
      %p45 = por %p43, %p44
      %p46 = scmp.ne.s32.totalorder %s32, %s33
      %p47 = scmp.eq.s32.totalorder %s25, 1
      %p48 = por %p46, %p47
      %p50 = scmp.ne.s32.totalorder %s33, %s49
      %p51 = scmp.eq.s32.totalorder %s25, 0
      %p52 = por %p50, %p51
      %s53 = ssub.s32 %s19, %s26
      %p54 = scmp.eq.s32.totalorder %s53, 0
      %s56 = sadd.s32 %s55, 1
      %s57 = scalar_select %p54, %s55, %s56
      %p60 = pneg %p54
      %p61 = scmp.eq.s32.totalorder %s19, 1
      %p62 = por %p60, %p61
      %p63 = scmp.ne.s32.totalorder %s55, %s58
      %p64 = scmp.eq.s32.totalorder %s19, 0
      %p65 = por %p63, %p64
      %p66 = scmp.ne.s32.totalorder %s55, %s58
      %p67 = scmp.eq.s32.totalorder %s24, 1
      %p68 = por %p66, %p67
      %p69 = scmp.ne.s32.totalorder %s58, %s59
      %p70 = scmp.eq.s32.totalorder %s24, 0
      %p71 = por %p69, %p70
      %p72 = scmp.ne.s32.totalorder %s58, %s59
      %p73 = scmp.eq.s32.totalorder %s25, 1
      %p74 = por %p72, %p73
      %p76 = scmp.ne.s32.totalorder %s59, %s75
      %p77 = scmp.eq.s32.totalorder %s25, 0
      %p78 = por %p76, %p77
      %s80 = sadd.s32 %s79, 1
      %p83 = scmp.eq.s32.totalorder %s19, 1
      %p84 = scmp.ne.s32.totalorder %s79, %s81
      %p85 = scmp.eq.s32.totalorder %s19, 0
      %p86 = por %p84, %p85
      %p87 = scmp.ne.s32.totalorder %s79, %s81
      %p88 = scmp.eq.s32.totalorder %s24, 1
      %p89 = por %p87, %p88
      %p90 = scmp.ne.s32.totalorder %s81, %s82
      %p91 = scmp.eq.s32.totalorder %s24, 0
      %p92 = por %p90, %p91
      %p93 = scmp.ne.s32.totalorder %s81, %s82
      %p94 = scmp.eq.s32.totalorder %s25, 1
      %p95 = por %p93, %p94
      %p97 = scmp.ne.s32.totalorder %s82, %s96
      %p98 = scmp.eq.s32.totalorder %s25, 0
      %p99 = por %p97, %p98
      %s101 = sadd.s32 %s100, 1
      %p104 = scmp.eq.s32.totalorder %s19, 1
      %p105 = scmp.ne.s32.totalorder %s100, %s102
      %p106 = scmp.eq.s32.totalorder %s19, 0
      %p107 = por %p105, %p106
      %p108 = scmp.ne.s32.totalorder %s100, %s102
      %p109 = scmp.eq.s32.totalorder %s24, 1
      %p110 = por %p108, %p109
      %p111 = scmp.ne.s32.totalorder %s102, %s103
      %p112 = scmp.eq.s32.totalorder %s24, 0
      %p113 = por %p111, %p112
      %p114 = scmp.ne.s32.totalorder %s102, %s103
      %p115 = scmp.eq.s32.totalorder %s25, 1
      %p116 = por %p114, %p115
      %p118 = scmp.ne.s32.totalorder %s103, %s117
      %p119 = scmp.eq.s32.totalorder %s25, 0
      %p120 = por %p118, %p119
      %s122 = sadd.s32 %s121, 1
      %p125 = scmp.eq.s32.totalorder %s19, 1
      %p126 = scmp.ne.s32.totalorder %s121, %s123
      %p127 = scmp.eq.s32.totalorder %s19, 0
      %p128 = por %p126, %p127
      %p129 = scmp.ne.s32.totalorder %s121, %s123
      %p130 = scmp.eq.s32.totalorder %s24, 1
      %p131 = por %p129, %p130
      %p132 = scmp.ne.s32.totalorder %s123, %s124
      %p133 = scmp.eq.s32.totalorder %s24, 0
      %p134 = por %p132, %p133
      %p135 = scmp.ne.s32.totalorder %s123, %s124
      %p136 = scmp.eq.s32.totalorder %s25, 1
      %p137 = por %p135, %p136
      %p139 = scmp.ne.s32.totalorder %s124, %s138
      %p140 = scmp.eq.s32.totalorder %s25, 0
      %p141 = por %p139, %p140
      %s142 = ssub.s32 %s19, %s26
      %p143 = scmp.eq.s32.totalorder %s142, 0
      %s145 = sadd.s32 %s144, 1
      %s146 = scalar_select %p143, %s144, %s145
      %p149 = pneg %p143
      %p150 = scmp.eq.s32.totalorder %s19, 1
      %p151 = por %p149, %p150
      %p152 = scmp.ne.s32.totalorder %s144, %s147
      %p153 = scmp.eq.s32.totalorder %s19, 0
      %p154 = por %p152, %p153
      %p155 = scmp.ne.s32.totalorder %s144, %s147
      %p156 = scmp.eq.s32.totalorder %s24, 1
      %p157 = por %p155, %p156
      %p158 = scmp.ne.s32.totalorder %s147, %s148
      %p159 = scmp.eq.s32.totalorder %s24, 0
      %p160 = por %p158, %p159
      %p161 = scmp.ne.s32.totalorder %s147, %s148
      %p162 = scmp.eq.s32.totalorder %s25, 1
      %p163 = por %p161, %p162
      %p165 = scmp.ne.s32.totalorder %s148, %s164
      %p166 = scmp.eq.s32.totalorder %s25, 0
      %p167 = por %p165, %p166
      %s168 = ssub.s32 %s19, %s26
      %p169 = scmp.eq.s32.totalorder %s168, 0
      %s171 = sadd.s32 %s170, 1
      %s172 = scalar_select %p169, %s170, %s171
      %p175 = pneg %p169
      %p176 = scmp.eq.s32.totalorder %s19, 1
      %p177 = por %p175, %p176
      %p178 = scmp.ne.s32.totalorder %s170, %s173
      %p179 = scmp.eq.s32.totalorder %s19, 0
      %p180 = por %p178, %p179
      %p181 = scmp.ne.s32.totalorder %s170, %s173
      %p182 = scmp.eq.s32.totalorder %s24, 1
      %p183 = por %p181, %p182
      %p184 = scmp.ne.s32.totalorder %s173, %s174
      %p185 = scmp.eq.s32.totalorder %s24, 0
      %p186 = por %p184, %p185
      %p187 = scmp.ne.s32.totalorder %s173, %s174
      %p188 = scmp.eq.s32.totalorder %s25, 1
      %p189 = por %p187, %p188
      %p191 = scmp.ne.s32.totalorder %s174, %s190
      %p192 = scmp.eq.s32.totalorder %s25, 0
      %p193 = por %p191, %p192
      %p194 = scmp.le.s32.totalorder 1, %s19
      %p195 = scmp.lt.s32.totalorder %s19, 3
      %p196 = pnand %p194, %p195
      %p197 = pneg %p196
      // Predicated region
      $region9: #{tpu_custom_call.1} parent=5 // pred_check
        _
      $region10: #{tpu_custom_call.1} parent=5 // pred_check_branch
        %199 = sbr.rel (%p196) target = $region12
      $region11: #{tpu_custom_call.1} parent=5 // pred_region
        %s200 = ssub.s32 %s19, 1
        // Predicated region
        $region13: #{tpu_custom_call.1} parent=11 // pred_check
          %p201 = pneg %p92
        $region14: #{tpu_custom_call.1} parent=11 // pred_check_branch
          %203 = sbr.rel (%p201) target = $region16
        $region15: #{tpu_custom_call.1} parent=11 // pred_region
          _
        $region16: #{tpu_custom_call.1} parent=11 // pred_fallthru
          _
        // Predicated region
        $region17: #{tpu_custom_call.1} parent=11 // pred_check
          %p204 = pneg %p113
        $region18: #{tpu_custom_call.1} parent=11 // pred_check_branch
          %206 = sbr.rel (%p204) target = $region20
        $region19: #{tpu_custom_call.1} parent=11 // pred_region
          _
        $region20: #{tpu_custom_call.1} parent=11 // pred_fallthru
          _
        // Predicated region
        $region21: #{tpu_custom_call.1} parent=11 // pred_check
          %p207 = pneg %p134
        $region22: #{tpu_custom_call.1} parent=11 // pred_check_branch
          %209 = sbr.rel (%p207) target = $region24
        $region23: #{tpu_custom_call.1} parent=11 // pred_region
          _
        $region24: #{tpu_custom_call.1} parent=11 // pred_fallthru
          _
      $region12: #{tpu_custom_call.1} parent=5 // pred_fallthru
        _
      %p210 = scmp.lt.s32.totalorder %s19, 2
      // Predicated region
      $region25: #{tpu_custom_call.1} parent=5 // pred_check
        %p211 = pneg %p210
      $region26: #{tpu_custom_call.1} parent=5 // pred_check_branch
        %213 = sbr.rel (%p211) target = $region28
      $region27: #{tpu_custom_call.1} parent=5 // pred_region
        // Predicated region
        $region29: #{tpu_custom_call.1} parent=27 // pred_check
          %p214 = pneg %p39
        $region30: #{tpu_custom_call.1} parent=27 // pred_check_branch
          %216 = sbr.rel (%p214) target = $region32
        $region31: #{tpu_custom_call.1} parent=27 // pred_region
          %p217 = scmp.lt.s32.totalorder %s19, 1
          %s218 = scalar_select %p217, %s19, 1
          %s219 = smul.addr %s218, 54
          %s220 = smul.addr %s219, 8
          %s221 = scalar_lea.vmem %s0, %s220
        $region32: #{tpu_custom_call.1} parent=27 // pred_fallthru
          _
        // Predicated region
        $region33: #{tpu_custom_call.1} parent=27 // pred_check
          %p222 = pneg %p65
        $region34: #{tpu_custom_call.1} parent=27 // pred_check_branch
          %224 = sbr.rel (%p222) target = $region36
        $region35: #{tpu_custom_call.1} parent=27 // pred_region
          %p225 = scmp.lt.s32.totalorder %s19, 1
          %s226 = scalar_select %p225, %s19, 1
          %s227 = smul.addr %s226, 20
          %s228 = smul.addr %s227, 8
          %s229 = scalar_lea.vmem %s1, %s228
        $region36: #{tpu_custom_call.1} parent=27 // pred_fallthru
          _
      $region28: #{tpu_custom_call.1} parent=5 // pred_fallthru
        _
      %p230 = scmp.le.s32.totalorder 1, %s19
      %p231 = scmp.lt.s32.totalorder %s19, 3
      %p232 = pnand %p230, %p231
      %p233 = pneg %p232
      // Predicated region
      $region37: #{tpu_custom_call.1} parent=5 // pred_check
        _
      $region38: #{tpu_custom_call.1} parent=5 // pred_check_branch
        %235 = sbr.rel (%p232) target = $region40
      $region39: #{tpu_custom_call.1} parent=5 // pred_region
        %s236 = ssub.s32 %s19, 1
        %p237 = scmp.lt.s32.totalorder %s24, 1
        %s238 = scalar_select %p237, %s24, 1
        %s239 = smul.addr %s238, 54
        %s240 = smul.addr %s239, 8
        %s241 = scalar_lea.vmem %s0, %s240
        %p242 = pneg %p45
        %p243 = pneg %p42
        %p244 = scmp.lt.s32.totalorder %s24, 1
        %s245 = scalar_select %p244, %s24, 1
        %s246 = smul.addr %s245, 20
        %s247 = smul.addr %s246, 8
        %s248 = scalar_lea.vmem %s1, %s247
        %p249 = pneg %p71
        %p250 = pneg %p68
        %p251 = pneg %p92
        %p252 = pneg %p89
        %p253 = pneg %p113
        %p254 = pneg %p110
        %p255 = pneg %p134
        %p256 = pneg %p131
        %p257 = pneg %p160
        %p258 = pneg %p157
        %s259 = sand.u32 %s147, 1
        %s260 = scalar_lea.sflag [#allocation3], %s259
        %s261 = sand.u32 %s147, 1
        %s262 = smul.addr %s261, 128
        %s263 = scalar_lea.vmem [#allocation2], %s262
        %p264 = pneg %p186
        %p265 = pneg %p183
        %s266 = sand.u32 %s173, 1
        %s267 = scalar_lea.sflag [#allocation5], %s266
        %s268 = sand.u32 %s173, 1
        %s269 = smul.addr %s268, 2
        %s270 = scalar_lea.vmem [#allocation4], %s269
        %p271 = scmp.lt.s32.totalorder %s24, 1
        %s272 = scalar_select %p271, %s24, 1
        %s273 = smul.addr %s272, 54
        %s274 = smul.addr %s273, 8
        %s275 = scalar_lea.vmem %s0, %s274
        %p276 = scmp.lt.s32.totalorder %s24, 1
        %s277 = scalar_select %p276, %s24, 1
        %s278 = smul.addr %s277, 20
        %s279 = smul.addr %s278, 8
        %s280 = scalar_lea.vmem %s1, %s279
        %v282 = vld [vmem:[%s275] sm:$0xff]
        %v283 = vld [vmem:[%s275 + $0x8] sm:$0xff]
        %v284 = vld [vmem:[%s275 + $0x10] sm:$0x3]
        %v285 = vld [vmem:[%s275 + $0x18] sm:$0xff]
        %v286 = vld [vmem:[%s275 + $0x20] sm:$0xff]
        %v287 = vld [vmem:[%s275 + $0x28] sm:$0x3]
        %v288 = vld [vmem:[%s275 + $0x30] sm:$0xff]
        %v289 = vld [vmem:[%s275 + $0x38] sm:$0xff]
        %v290 = vld [vmem:[%s275 + $0x40] sm:$0x3]
        %v291 = vld [vmem:[%s275 + $0x48] sm:$0xff]
        %v292 = vld [vmem:[%s275 + $0x50] sm:$0xff]
        %v293 = vld [vmem:[%s275 + $0x58] sm:$0x3]
        %v294 = vld [vmem:[%s275 + $0x60] sm:$0xff]
        %v295 = vld [vmem:[%s275 + $0x68] sm:$0xff]
        %v296 = vld [vmem:[%s275 + $0x70] sm:$0x3]
        %v297 = vld [vmem:[%s275 + $0x78] sm:$0xff]
        %v298 = vld [vmem:[%s275 + $0x80] sm:$0xff]
        %v299 = vld [vmem:[%s275 + $0x88] sm:$0x3]
        %v300 = vld [vmem:[%s275 + $0x90] sm:$0xff]
        %v301 = vld [vmem:[%s275 + $0x98] sm:$0xff]
        %v302 = vld [vmem:[%s275 + $0xa0] sm:$0x3]
        %v303 = vld [vmem:[%s275 + $0xa8] sm:$0xff]
        %v304 = vld [vmem:[%s275 + $0xb0] sm:$0xff]
        %v305 = vld [vmem:[%s275 + $0xb8] sm:$0x3]
        %v306 = vld [vmem:[%s275 + $0xc0] sm:$0xff]
        %v307 = vld [vmem:[%s275 + $0xc8] sm:$0xff]
        %v308 = vld [vmem:[%s275 + $0xd0] sm:$0x3]
        %v309 = vld [vmem:[%s275 + $0xd8] sm:$0xff]
        %v310 = vld [vmem:[%s275 + $0xe0] sm:$0xff]
        %v311 = vld [vmem:[%s275 + $0xe8] sm:$0x3]
        %v312 = vld [vmem:[%s275 + $0xf0] sm:$0xff]
        %v313 = vld [vmem:[%s275 + $0xf8] sm:$0xff]
        %v314 = vld [vmem:[%s275 + $0x100] sm:$0x3]
        %v315 = vld [vmem:[%s275 + $0x108] sm:$0xff]
        %v316 = vld [vmem:[%s275 + $0x110] sm:$0xff]
        %v317 = vld [vmem:[%s275 + $0x118] sm:$0x3]
        %v318 = vld [vmem:[%s275 + $0x120] sm:$0xff]
        %v319 = vld [vmem:[%s275 + $0x128] sm:$0xff]
        %v320 = vld [vmem:[%s275 + $0x130] sm:$0x3]
        %v321 = vld [vmem:[%s275 + $0x138] sm:$0xff]
        %v322 = vld [vmem:[%s275 + $0x140] sm:$0xff]
        %v323 = vld [vmem:[%s275 + $0x148] sm:$0x3]
        %v324 = vld [vmem:[%s275 + $0x150] sm:$0xff]
        %v325 = vld [vmem:[%s275 + $0x158] sm:$0xff]
        %v326 = vld [vmem:[%s275 + $0x160] sm:$0x3]
        %v327 = vld [vmem:[%s275 + $0x168] sm:$0xff]
        %v328 = vld [vmem:[%s275 + $0x170] sm:$0xff]
        %v329 = vld [vmem:[%s275 + $0x178] sm:$0x3]
        %v330 = vld [vmem:[%s275 + $0x180] sm:$0xff]
        %v331 = vld [vmem:[%s275 + $0x188] sm:$0xff]
        %v332 = vld [vmem:[%s275 + $0x190] sm:$0x3]
        %v333 = vld [vmem:[%s275 + $0x198] sm:$0xff]
        %v334 = vld [vmem:[%s275 + $0x1a0] sm:$0xff]
        %v335 = vld [vmem:[%s275 + $0x1a8] sm:$0x3]
        %v336 = vld [vmem:[%s280] sm:$0xff]
        %v337 = vld [vmem:[%s280 + $0x8] sm:$0x3]
        %v338 = vld [vmem:[%s280 + $0x10] sm:$0xff]
        %v339 = vld [vmem:[%s280 + $0x18] sm:$0x3]
        %v340 = vld [vmem:[%s280 + $0x20] sm:$0xff]
        %v341 = vld [vmem:[%s280 + $0x28] sm:$0x3]
        %v342 = vld [vmem:[%s280 + $0x30] sm:$0xff]
        %v343 = vld [vmem:[%s280 + $0x38] sm:$0x3]
        %v344 = vld [vmem:[%s280 + $0x40] sm:$0xff]
        %v345 = vld [vmem:[%s280 + $0x48] sm:$0x3]
        %v346 = vld [vmem:[%s280 + $0x50] sm:$0xff]
        %v347 = vld [vmem:[%s280 + $0x58] sm:$0x3]
        %v348 = vld [vmem:[%s280 + $0x60] sm:$0xff]
        %v349 = vld [vmem:[%s280 + $0x68] sm:$0x3]
        %v350 = vld [vmem:[%s280 + $0x70] sm:$0xff]
        %v351 = vld [vmem:[%s280 + $0x78] sm:$0x3]
        %v352 = vld [vmem:[%s280 + $0x80] sm:$0xff]
        %v353 = vld [vmem:[%s280 + $0x88] sm:$0x3]
        %v354 = vld [vmem:[%s280 + $0x90] sm:$0xff]
        %v355 = vld [vmem:[%s280 + $0x98] sm:$0x3]
        %v356 = vpack.c.bf16 %v282, %v282
        %v357 = vpack.c.bf16 %v283, %v283
        %v358 = vpack.c.bf16 %v285, %v285
        %v359 = vpack.c.bf16 %v286, %v286
        %v360 = vpack.c.bf16 %v288, %v288
        %v361 = vpack.c.bf16 %v289, %v289
        %v362 = vpack.c.bf16 %v291, %v291
        %v363 = vpack.c.bf16 %v292, %v292
        %v364 = vpack.c.bf16 %v294, %v294
        %v365 = vpack.c.bf16 %v295, %v295
        %v366 = vpack.c.bf16 %v297, %v297
        %v367 = vpack.c.bf16 %v298, %v298
        %v368 = vpack.c.bf16 %v300, %v300
        %v369 = vpack.c.bf16 %v301, %v301
        %v370 = vpack.c.bf16 %v303, %v303
        %v371 = vpack.c.bf16 %v304, %v304
        %v372 = vpack.c.bf16 %v306, %v306
        %v373 = vpack.c.bf16 %v307, %v307
        %v374 = vpack.c.bf16 %v309, %v309
        %v375 = vpack.c.bf16 %v310, %v310
        %v376 = vpack.c.bf16 %v312, %v312
        %v377 = vpack.c.bf16 %v313, %v313
        %v378 = vpack.c.bf16 %v315, %v315
        %v379 = vpack.c.bf16 %v316, %v316
        %v380 = vpack.c.bf16 %v318, %v318
        %v381 = vpack.c.bf16 %v319, %v319
        %v382 = vpack.c.bf16 %v321, %v321
        %v383 = vpack.c.bf16 %v322, %v322
        %v384 = vpack.c.bf16 %v324, %v324
        %v385 = vpack.c.bf16 %v325, %v325
        %v386 = vpack.c.bf16 %v327, %v327
        %v387 = vpack.c.bf16 %v328, %v328
        %vm436 = vcmask 1046528
        %v437 = vrot.slane %v282, 1
        %v438 = vrot.slane %v283, 1
        %v439 = vsel %vm436, %v437, %v438
        %v440 = vrot.slane %v284, 1
        %v441 = vsel %vm436, %v438, %v440
        %v442 = vrot.slane %v285, 1
        %v443 = vrot.slane %v286, 1
        %v444 = vsel %vm436, %v442, %v443
        %v445 = vrot.slane %v287, 1
        %v446 = vsel %vm436, %v443, %v445
        %v447 = vrot.slane %v288, 1
        %v448 = vrot.slane %v289, 1
        %v449 = vsel %vm436, %v447, %v448
        %v450 = vrot.slane %v290, 1
        %v451 = vsel %vm436, %v448, %v450
        %v452 = vrot.slane %v291, 1
        %v453 = vrot.slane %v292, 1
        %v454 = vsel %vm436, %v452, %v453
        %v455 = vrot.slane %v293, 1
        %v456 = vsel %vm436, %v453, %v455
        %v457 = vrot.slane %v294, 1
        %v458 = vrot.slane %v295, 1
        %v459 = vsel %vm436, %v457, %v458
        %v460 = vrot.slane %v296, 1
        %v461 = vsel %vm436, %v458, %v460
        %v462 = vrot.slane %v297, 1
        %v463 = vrot.slane %v298, 1
        %v464 = vsel %vm436, %v462, %v463
        %v465 = vrot.slane %v299, 1
        %v466 = vsel %vm436, %v463, %v465
        %v467 = vrot.slane %v300, 1
        %v468 = vrot.slane %v301, 1
        %v469 = vsel %vm436, %v467, %v468
        %v470 = vrot.slane %v302, 1
        %v471 = vsel %vm436, %v468, %v470
        %v472 = vrot.slane %v303, 1
        %v473 = vrot.slane %v304, 1
        %v474 = vsel %vm436, %v472, %v473
        %v475 = vrot.slane %v305, 1
        %v476 = vsel %vm436, %v473, %v475
        %v477 = vrot.slane %v306, 1
        %v478 = vrot.slane %v307, 1
        %v479 = vsel %vm436, %v477, %v478
        %v480 = vrot.slane %v308, 1
        %v481 = vsel %vm436, %v478, %v480
        %v482 = vrot.slane %v309, 1
        %v483 = vrot.slane %v310, 1
        %v484 = vsel %vm436, %v482, %v483
        %v485 = vrot.slane %v311, 1
        %v486 = vsel %vm436, %v483, %v485
        %v487 = vrot.slane %v312, 1
        %v488 = vrot.slane %v313, 1
        %v489 = vsel %vm436, %v487, %v488
        %v490 = vrot.slane %v314, 1
        %v491 = vsel %vm436, %v488, %v490
        %v492 = vrot.slane %v315, 1
        %v493 = vrot.slane %v316, 1
        %v494 = vsel %vm436, %v492, %v493
        %v495 = vrot.slane %v317, 1
        %v496 = vsel %vm436, %v493, %v495
        %v497 = vrot.slane %v318, 1
        %v498 = vrot.slane %v319, 1
        %v499 = vsel %vm436, %v497, %v498
        %v500 = vrot.slane %v320, 1
        %v501 = vsel %vm436, %v498, %v500
        %v502 = vrot.slane %v321, 1
        %v503 = vrot.slane %v322, 1
        %v504 = vsel %vm436, %v502, %v503
        %v505 = vrot.slane %v323, 1
        %v506 = vsel %vm436, %v503, %v505
        %v507 = vrot.slane %v324, 1
        %v508 = vrot.slane %v325, 1
        %v509 = vsel %vm436, %v507, %v508
        %v510 = vrot.slane %v326, 1
        %v511 = vsel %vm436, %v508, %v510
        %v512 = vrot.slane %v327, 1
        %v513 = vrot.slane %v328, 1
        %v514 = vsel %vm436, %v512, %v513
        %v515 = vrot.slane %v329, 1
        %v516 = vsel %vm436, %v513, %v515
        %v549 = vpack.c.bf16 %v439, %v439
        %v550 = vpack.c.bf16 %v441, %v441
        %v551 = vpack.c.bf16 %v444, %v444
        %v552 = vpack.c.bf16 %v446, %v446
        %v553 = vpack.c.bf16 %v449, %v449
        %v554 = vpack.c.bf16 %v451, %v451
        %v555 = vpack.c.bf16 %v454, %v454
        %v556 = vpack.c.bf16 %v456, %v456
        %v557 = vpack.c.bf16 %v459, %v459
        %v558 = vpack.c.bf16 %v461, %v461
        %v559 = vpack.c.bf16 %v464, %v464
        %v560 = vpack.c.bf16 %v466, %v466
        %v561 = vpack.c.bf16 %v469, %v469
        %v562 = vpack.c.bf16 %v471, %v471
        %v563 = vpack.c.bf16 %v474, %v474
        %v564 = vpack.c.bf16 %v476, %v476
        %v565 = vpack.c.bf16 %v479, %v479
        %v566 = vpack.c.bf16 %v481, %v481
        %v567 = vpack.c.bf16 %v484, %v484
        %v568 = vpack.c.bf16 %v486, %v486
        %v569 = vpack.c.bf16 %v489, %v489
        %v570 = vpack.c.bf16 %v491, %v491
        %v571 = vpack.c.bf16 %v494, %v494
        %v572 = vpack.c.bf16 %v496, %v496
        %v573 = vpack.c.bf16 %v499, %v499
        %v574 = vpack.c.bf16 %v501, %v501
        %v575 = vpack.c.bf16 %v504, %v504
        %v576 = vpack.c.bf16 %v506, %v506
        %v577 = vpack.c.bf16 %v509, %v509
        %v578 = vpack.c.bf16 %v511, %v511
        %v579 = vpack.c.bf16 %v514, %v514
        %v580 = vpack.c.bf16 %v516, %v516
        %vm581 = vcmask 1045504
        %v582 = vrot.slane %v282, 2
        %v583 = vrot.slane %v283, 2
        %v584 = vsel %vm581, %v582, %v583
        %v585 = vrot.slane %v284, 2
        %v586 = vsel %vm581, %v583, %v585
        %v587 = vrot.slane %v285, 2
        %v588 = vrot.slane %v286, 2
        %v589 = vsel %vm581, %v587, %v588
        %v590 = vrot.slane %v287, 2
        %v591 = vsel %vm581, %v588, %v590
        %v592 = vrot.slane %v288, 2
        %v593 = vrot.slane %v289, 2
        %v594 = vsel %vm581, %v592, %v593
        %v595 = vrot.slane %v290, 2
        %v596 = vsel %vm581, %v593, %v595
        %v597 = vrot.slane %v291, 2
        %v598 = vrot.slane %v292, 2
        %v599 = vsel %vm581, %v597, %v598
        %v600 = vrot.slane %v293, 2
        %v601 = vsel %vm581, %v598, %v600
        %v602 = vrot.slane %v294, 2
        %v603 = vrot.slane %v295, 2
        %v604 = vsel %vm581, %v602, %v603
        %v605 = vrot.slane %v296, 2
        %v606 = vsel %vm581, %v603, %v605
        %v607 = vrot.slane %v297, 2
        %v608 = vrot.slane %v298, 2
        %v609 = vsel %vm581, %v607, %v608
        %v610 = vrot.slane %v299, 2
        %v611 = vsel %vm581, %v608, %v610
        %v612 = vrot.slane %v300, 2
        %v613 = vrot.slane %v301, 2
        %v614 = vsel %vm581, %v612, %v613
        %v615 = vrot.slane %v302, 2
        %v616 = vsel %vm581, %v613, %v615
        %v617 = vrot.slane %v303, 2
        %v618 = vrot.slane %v304, 2
        %v619 = vsel %vm581, %v617, %v618
        %v620 = vrot.slane %v305, 2
        %v621 = vsel %vm581, %v618, %v620
        %v622 = vrot.slane %v306, 2
        %v623 = vrot.slane %v307, 2
        %v624 = vsel %vm581, %v622, %v623
        %v625 = vrot.slane %v308, 2
        %v626 = vsel %vm581, %v623, %v625
        %v627 = vrot.slane %v309, 2
        %v628 = vrot.slane %v310, 2
        %v629 = vsel %vm581, %v627, %v628
        %v630 = vrot.slane %v311, 2
        %v631 = vsel %vm581, %v628, %v630
        %v632 = vrot.slane %v312, 2
        %v633 = vrot.slane %v313, 2
        %v634 = vsel %vm581, %v632, %v633
        %v635 = vrot.slane %v314, 2
        %v636 = vsel %vm581, %v633, %v635
        %v637 = vrot.slane %v315, 2
        %v638 = vrot.slane %v316, 2
        %v639 = vsel %vm581, %v637, %v638
        %v640 = vrot.slane %v317, 2
        %v641 = vsel %vm581, %v638, %v640
        %v642 = vrot.slane %v318, 2
        %v643 = vrot.slane %v319, 2
        %v644 = vsel %vm581, %v642, %v643
        %v645 = vrot.slane %v320, 2
        %v646 = vsel %vm581, %v643, %v645
        %v647 = vrot.slane %v321, 2
        %v648 = vrot.slane %v322, 2
        %v649 = vsel %vm581, %v647, %v648
        %v650 = vrot.slane %v323, 2
        %v651 = vsel %vm581, %v648, %v650
        %v652 = vrot.slane %v324, 2
        %v653 = vrot.slane %v325, 2
        %v654 = vsel %vm581, %v652, %v653
        %v655 = vrot.slane %v326, 2
        %v656 = vsel %vm581, %v653, %v655
        %v657 = vrot.slane %v327, 2
        %v658 = vrot.slane %v328, 2
        %v659 = vsel %vm581, %v657, %v658
        %v660 = vrot.slane %v329, 2
        %v661 = vsel %vm581, %v658, %v660
        %v694 = vpack.c.bf16 %v584, %v584
        %v695 = vpack.c.bf16 %v586, %v586
        %v696 = vpack.c.bf16 %v589, %v589
        %v697 = vpack.c.bf16 %v591, %v591
        %v698 = vpack.c.bf16 %v594, %v594
        %v699 = vpack.c.bf16 %v596, %v596
        %v700 = vpack.c.bf16 %v599, %v599
        %v701 = vpack.c.bf16 %v601, %v601
        %v702 = vpack.c.bf16 %v604, %v604
        %v703 = vpack.c.bf16 %v606, %v606
        %v704 = vpack.c.bf16 %v609, %v609
        %v705 = vpack.c.bf16 %v611, %v611
        %v706 = vpack.c.bf16 %v614, %v614
        %v707 = vpack.c.bf16 %v616, %v616
        %v708 = vpack.c.bf16 %v619, %v619
        %v709 = vpack.c.bf16 %v621, %v621
        %v710 = vpack.c.bf16 %v624, %v624
        %v711 = vpack.c.bf16 %v626, %v626
        %v712 = vpack.c.bf16 %v629, %v629
        %v713 = vpack.c.bf16 %v631, %v631
        %v714 = vpack.c.bf16 %v634, %v634
        %v715 = vpack.c.bf16 %v636, %v636
        %v716 = vpack.c.bf16 %v639, %v639
        %v717 = vpack.c.bf16 %v641, %v641
        %v718 = vpack.c.bf16 %v644, %v644
        %v719 = vpack.c.bf16 %v646, %v646
        %v720 = vpack.c.bf16 %v649, %v649
        %v721 = vpack.c.bf16 %v651, %v651
        %v722 = vpack.c.bf16 %v654, %v654
        %v723 = vpack.c.bf16 %v656, %v656
        %v724 = vpack.c.bf16 %v659, %v659
        %v725 = vpack.c.bf16 %v661, %v661
        %v726 = vpack.c.bf16 %v330, %v330
        %v727 = vpack.c.bf16 %v331, %v331
        %v731 = vrot.slane %v330, 1
        %v732 = vrot.slane %v331, 1
        %v733 = vsel %vm436, %v731, %v732
        %v734 = vrot.slane %v332, 1
        %v735 = vsel %vm436, %v732, %v734
        %v738 = vpack.c.bf16 %v733, %v733
        %v739 = vpack.c.bf16 %v735, %v735
        %v740 = vrot.slane %v330, 2
        %v741 = vrot.slane %v331, 2
        %v742 = vsel %vm581, %v740, %v741
        %v743 = vrot.slane %v332, 2
        %v744 = vsel %vm581, %v741, %v743
        %v747 = vpack.c.bf16 %v742, %v742
        %v748 = vpack.c.bf16 %v744, %v744
        %v749 = vpack.c.bf16 %v333, %v333
        %v750 = vpack.c.bf16 %v334, %v334
        %v754 = vrot.slane %v333, 1
        %v755 = vrot.slane %v334, 1
        %v756 = vsel %vm436, %v754, %v755
        %v757 = vrot.slane %v335, 1
        %v758 = vsel %vm436, %v755, %v757
        %v761 = vpack.c.bf16 %v756, %v756
        %v762 = vpack.c.bf16 %v758, %v758
        %v763 = vrot.slane %v333, 2
        %v764 = vrot.slane %v334, 2
        %v765 = vsel %vm581, %v763, %v764
        %v766 = vrot.slane %v335, 2
        %v767 = vsel %vm581, %v764, %v766
        %v770 = vpack.c.bf16 %v765, %v765
        %v771 = vpack.c.bf16 %v767, %v767
        %v804 = vunpack.c.l.b16 %v356
        %v805 = vunpack.c.l.b16 %v357
        %v806 = vunpack.c.l.b16 %v358
        %v807 = vunpack.c.l.b16 %v359
        %v808 = vunpack.c.l.b16 %v360
        %v809 = vunpack.c.l.b16 %v361
        %v810 = vunpack.c.l.b16 %v362
        %v811 = vunpack.c.l.b16 %v363
        %v812 = vunpack.c.l.b16 %v364
        %v813 = vunpack.c.l.b16 %v365
        %v814 = vunpack.c.l.b16 %v366
        %v815 = vunpack.c.l.b16 %v367
        %v816 = vunpack.c.l.b16 %v368
        %v817 = vunpack.c.l.b16 %v369
        %v818 = vunpack.c.l.b16 %v370
        %v819 = vunpack.c.l.b16 %v371
        %v820 = vunpack.c.l.b16 %v372
        %v821 = vunpack.c.l.b16 %v373
        %v822 = vunpack.c.l.b16 %v374
        %v823 = vunpack.c.l.b16 %v375
        %v824 = vunpack.c.l.b16 %v376
        %v825 = vunpack.c.l.b16 %v377
        %v826 = vunpack.c.l.b16 %v378
        %v827 = vunpack.c.l.b16 %v379
        %v828 = vunpack.c.l.b16 %v380
        %v829 = vunpack.c.l.b16 %v381
        %v830 = vunpack.c.l.b16 %v382
        %v831 = vunpack.c.l.b16 %v383
        %v832 = vunpack.c.l.b16 %v384
        %v833 = vunpack.c.l.b16 %v385
        %v834 = vunpack.c.l.b16 %v386
        %v835 = vunpack.c.l.b16 %v387
        %v836 = vpack.c.b16 %v805, %v804
        %v837 = vpack.c.b16 %v807, %v806
        %v838 = vpack.c.b16 %v809, %v808
        %v839 = vpack.c.b16 %v811, %v810
        %v840 = vpack.c.b16 %v813, %v812
        %v841 = vpack.c.b16 %v815, %v814
        %v842 = vpack.c.b16 %v817, %v816
        %v843 = vpack.c.b16 %v819, %v818
        %v844 = vpack.c.b16 %v821, %v820
        %v845 = vpack.c.b16 %v823, %v822
        %v846 = vpack.c.b16 %v825, %v824
        %v847 = vpack.c.b16 %v827, %v826
        %v848 = vpack.c.b16 %v829, %v828
        %v849 = vpack.c.b16 %v831, %v830
        %v850 = vpack.c.b16 %v833, %v832
        %v851 = vpack.c.b16 %v835, %v834
        %v884 = vunpack.c.l.b16 %v549
        %v885 = vunpack.c.l.b16 %v550
        %v886 = vunpack.c.l.b16 %v551
        %v887 = vunpack.c.l.b16 %v552
        %v888 = vunpack.c.l.b16 %v553
        %v889 = vunpack.c.l.b16 %v554
        %v890 = vunpack.c.l.b16 %v555
        %v891 = vunpack.c.l.b16 %v556
        %v892 = vunpack.c.l.b16 %v557
        %v893 = vunpack.c.l.b16 %v558
        %v894 = vunpack.c.l.b16 %v559
        %v895 = vunpack.c.l.b16 %v560
        %v896 = vunpack.c.l.b16 %v561
        %v897 = vunpack.c.l.b16 %v562
        %v898 = vunpack.c.l.b16 %v563
        %v899 = vunpack.c.l.b16 %v564
        %v900 = vunpack.c.l.b16 %v565
        %v901 = vunpack.c.l.b16 %v566
        %v902 = vunpack.c.l.b16 %v567
        %v903 = vunpack.c.l.b16 %v568
        %v904 = vunpack.c.l.b16 %v569
        %v905 = vunpack.c.l.b16 %v570
        %v906 = vunpack.c.l.b16 %v571
        %v907 = vunpack.c.l.b16 %v572
        %v908 = vunpack.c.l.b16 %v573
        %v909 = vunpack.c.l.b16 %v574
        %v910 = vunpack.c.l.b16 %v575
        %v911 = vunpack.c.l.b16 %v576
        %v912 = vunpack.c.l.b16 %v577
        %v913 = vunpack.c.l.b16 %v578
        %v914 = vunpack.c.l.b16 %v579
        %v915 = vunpack.c.l.b16 %v580
        %v916 = vpack.c.b16 %v885, %v884
        %v917 = vpack.c.b16 %v887, %v886
        %v918 = vpack.c.b16 %v889, %v888
        %v919 = vpack.c.b16 %v891, %v890
        %v920 = vpack.c.b16 %v893, %v892
        %v921 = vpack.c.b16 %v895, %v894
        %v922 = vpack.c.b16 %v897, %v896
        %v923 = vpack.c.b16 %v899, %v898
        %v924 = vpack.c.b16 %v901, %v900
        %v925 = vpack.c.b16 %v903, %v902
        %v926 = vpack.c.b16 %v905, %v904
        %v927 = vpack.c.b16 %v907, %v906
        %v928 = vpack.c.b16 %v909, %v908
        %v929 = vpack.c.b16 %v911, %v910
        %v930 = vpack.c.b16 %v913, %v912
        %v931 = vpack.c.b16 %v915, %v914
        %932 = vrot.lane.b32.xlu0 %v916, 4
        %v933 = vpop.permute.xlu0 %932
        %934 = vrot.lane.b32.xlu0 %v917, 4
        %v935 = vpop.permute.xlu0 %934
        %936 = vrot.lane.b32.xlu0 %v918, 4
        %v937 = vpop.permute.xlu0 %936
        %938 = vrot.lane.b32.xlu0 %v919, 4
        %v939 = vpop.permute.xlu0 %938
        %940 = vrot.lane.b32.xlu0 %v920, 4
        %v941 = vpop.permute.xlu0 %940
        %942 = vrot.lane.b32.xlu0 %v921, 4
        %v943 = vpop.permute.xlu0 %942
        %944 = vrot.lane.b32.xlu0 %v922, 4
        %v945 = vpop.permute.xlu0 %944
        %946 = vrot.lane.b32.xlu0 %v923, 4
        %v947 = vpop.permute.xlu0 %946
        %948 = vrot.lane.b32.xlu0 %v924, 4
        %v949 = vpop.permute.xlu0 %948
        %950 = vrot.lane.b32.xlu0 %v925, 4
        %v951 = vpop.permute.xlu0 %950
        %952 = vrot.lane.b32.xlu0 %v926, 4
        %v953 = vpop.permute.xlu0 %952
        %954 = vrot.lane.b32.xlu0 %v927, 4
        %v955 = vpop.permute.xlu0 %954
        %956 = vrot.lane.b32.xlu0 %v928, 4
        %v957 = vpop.permute.xlu0 %956
        %958 = vrot.lane.b32.xlu0 %v929, 4
        %v959 = vpop.permute.xlu0 %958
        %960 = vrot.lane.b32.xlu0 %v930, 4
        %v961 = vpop.permute.xlu0 %960
        %962 = vrot.lane.b32.xlu0 %v931, 4
        %v963 = vpop.permute.xlu0 %962
        %v996 = vunpack.c.l.b16 %v694
        %v997 = vunpack.c.l.b16 %v695
        %v998 = vunpack.c.l.b16 %v696
        %v999 = vunpack.c.l.b16 %v697
        %v1000 = vunpack.c.l.b16 %v698
        %v1001 = vunpack.c.l.b16 %v699
        %v1002 = vunpack.c.l.b16 %v700
        %v1003 = vunpack.c.l.b16 %v701
        %v1004 = vunpack.c.l.b16 %v702
        %v1005 = vunpack.c.l.b16 %v703
        %v1006 = vunpack.c.l.b16 %v704
        %v1007 = vunpack.c.l.b16 %v705
        %v1008 = vunpack.c.l.b16 %v706
        %v1009 = vunpack.c.l.b16 %v707
        %v1010 = vunpack.c.l.b16 %v708
        %v1011 = vunpack.c.l.b16 %v709
        %v1012 = vunpack.c.l.b16 %v710
        %v1013 = vunpack.c.l.b16 %v711
        %v1014 = vunpack.c.l.b16 %v712
        %v1015 = vunpack.c.l.b16 %v713
        %v1016 = vunpack.c.l.b16 %v714
        %v1017 = vunpack.c.l.b16 %v715
        %v1018 = vunpack.c.l.b16 %v716
        %v1019 = vunpack.c.l.b16 %v717
        %v1020 = vunpack.c.l.b16 %v718
        %v1021 = vunpack.c.l.b16 %v719
        %v1022 = vunpack.c.l.b16 %v720
        %v1023 = vunpack.c.l.b16 %v721
        %v1024 = vunpack.c.l.b16 %v722
        %v1025 = vunpack.c.l.b16 %v723
        %v1026 = vunpack.c.l.b16 %v724
        %v1027 = vunpack.c.l.b16 %v725
        %v1028 = vpack.c.b16 %v997, %v996
        %v1029 = vpack.c.b16 %v999, %v998
        %v1030 = vpack.c.b16 %v1001, %v1000
        %v1031 = vpack.c.b16 %v1003, %v1002
        %v1032 = vpack.c.b16 %v1005, %v1004
        %v1033 = vpack.c.b16 %v1007, %v1006
        %v1034 = vpack.c.b16 %v1009, %v1008
        %v1035 = vpack.c.b16 %v1011, %v1010
        %v1036 = vpack.c.b16 %v1013, %v1012
        %v1037 = vpack.c.b16 %v1015, %v1014
        %v1038 = vpack.c.b16 %v1017, %v1016
        %v1039 = vpack.c.b16 %v1019, %v1018
        %v1040 = vpack.c.b16 %v1021, %v1020
        %v1041 = vpack.c.b16 %v1023, %v1022
        %v1042 = vpack.c.b16 %v1025, %v1024
        %v1043 = vpack.c.b16 %v1027, %v1026
        %1044 = vrot.lane.b32.xlu0 %v1028, 8
        %v1045 = vpop.permute.xlu0 %1044
        %1046 = vrot.lane.b32.xlu0 %v1029, 8
        %v1047 = vpop.permute.xlu0 %1046
        %1048 = vrot.lane.b32.xlu0 %v1030, 8
        %v1049 = vpop.permute.xlu0 %1048
        %1050 = vrot.lane.b32.xlu0 %v1031, 8
        %v1051 = vpop.permute.xlu0 %1050
        %1052 = vrot.lane.b32.xlu0 %v1032, 8
        %v1053 = vpop.permute.xlu0 %1052
        %1054 = vrot.lane.b32.xlu0 %v1033, 8
        %v1055 = vpop.permute.xlu0 %1054
        %1056 = vrot.lane.b32.xlu0 %v1034, 8
        %v1057 = vpop.permute.xlu0 %1056
        %1058 = vrot.lane.b32.xlu0 %v1035, 8
        %v1059 = vpop.permute.xlu0 %1058
        %1060 = vrot.lane.b32.xlu0 %v1036, 8
        %v1061 = vpop.permute.xlu0 %1060
        %1062 = vrot.lane.b32.xlu0 %v1037, 8
        %v1063 = vpop.permute.xlu0 %1062
        %1064 = vrot.lane.b32.xlu0 %v1038, 8
        %v1065 = vpop.permute.xlu0 %1064
        %1066 = vrot.lane.b32.xlu0 %v1039, 8
        %v1067 = vpop.permute.xlu0 %1066
        %1068 = vrot.lane.b32.xlu0 %v1040, 8
        %v1069 = vpop.permute.xlu0 %1068
        %1070 = vrot.lane.b32.xlu0 %v1041, 8
        %v1071 = vpop.permute.xlu0 %1070
        %1072 = vrot.lane.b32.xlu0 %v1042, 8
        %v1073 = vpop.permute.xlu0 %1072
        %1074 = vrot.lane.b32.xlu0 %v1043, 8
        %v1075 = vpop.permute.xlu0 %1074
        %v1078 = vunpack.c.l.b16 %v726
        %v1079 = vunpack.c.l.b16 %v727
        %v1080 = vpack.c.b16 %v1079, %v1078
        %1081 = vrot.lane.b32.xlu0 %v837, 12
        %v1082 = vpop.permute.xlu0 %1081
        %1083 = vrot.lane.b32.xlu0 %v838, 12
        %v1084 = vpop.permute.xlu0 %1083
        %1085 = vrot.lane.b32.xlu0 %v839, 12
        %v1086 = vpop.permute.xlu0 %1085
        %1087 = vrot.lane.b32.xlu0 %v840, 12
        %v1088 = vpop.permute.xlu0 %1087
        %1089 = vrot.lane.b32.xlu0 %v841, 12
        %v1090 = vpop.permute.xlu0 %1089
        %1091 = vrot.lane.b32.xlu0 %v842, 12
        %v1092 = vpop.permute.xlu0 %1091
        %1093 = vrot.lane.b32.xlu0 %v843, 12
        %v1094 = vpop.permute.xlu0 %1093
        %1095 = vrot.lane.b32.xlu0 %v844, 12
        %v1096 = vpop.permute.xlu0 %1095
        %1097 = vrot.lane.b32.xlu0 %v845, 12
        %v1098 = vpop.permute.xlu0 %1097
        %1099 = vrot.lane.b32.xlu0 %v846, 12
        %v1100 = vpop.permute.xlu0 %1099
        %1101 = vrot.lane.b32.xlu0 %v847, 12
        %v1102 = vpop.permute.xlu0 %1101
        %1103 = vrot.lane.b32.xlu0 %v848, 12
        %v1104 = vpop.permute.xlu0 %1103
        %1105 = vrot.lane.b32.xlu0 %v849, 12
        %v1106 = vpop.permute.xlu0 %1105
        %1107 = vrot.lane.b32.xlu0 %v850, 12
        %v1108 = vpop.permute.xlu0 %1107
        %1109 = vrot.lane.b32.xlu0 %v851, 12
        %v1110 = vpop.permute.xlu0 %1109
        %1111 = vrot.lane.b32.xlu0 %v1080, 12
        %v1112 = vpop.permute.xlu0 %1111
        %v1115 = vunpack.c.l.b16 %v738
        %v1116 = vunpack.c.l.b16 %v739
        %v1117 = vpack.c.b16 %v1116, %v1115
        %1118 = vrot.lane.b32.xlu0 %v917, 16
        %v1119 = vpop.permute.xlu0 %1118
        %1120 = vrot.lane.b32.xlu0 %v918, 16
        %v1121 = vpop.permute.xlu0 %1120
        %1122 = vrot.lane.b32.xlu0 %v919, 16
        %v1123 = vpop.permute.xlu0 %1122
        %1124 = vrot.lane.b32.xlu0 %v920, 16
        %v1125 = vpop.permute.xlu0 %1124
        %1126 = vrot.lane.b32.xlu0 %v921, 16
        %v1127 = vpop.permute.xlu0 %1126
        %1128 = vrot.lane.b32.xlu0 %v922, 16
        %v1129 = vpop.permute.xlu0 %1128
        %1130 = vrot.lane.b32.xlu0 %v923, 16
        %v1131 = vpop.permute.xlu0 %1130
        %1132 = vrot.lane.b32.xlu0 %v924, 16
        %v1133 = vpop.permute.xlu0 %1132
        %1134 = vrot.lane.b32.xlu0 %v925, 16
        %v1135 = vpop.permute.xlu0 %1134
        %1136 = vrot.lane.b32.xlu0 %v926, 16
        %v1137 = vpop.permute.xlu0 %1136
        %1138 = vrot.lane.b32.xlu0 %v927, 16
        %v1139 = vpop.permute.xlu0 %1138
        %1140 = vrot.lane.b32.xlu0 %v928, 16
        %v1141 = vpop.permute.xlu0 %1140
        %1142 = vrot.lane.b32.xlu0 %v929, 16
        %v1143 = vpop.permute.xlu0 %1142
        %1144 = vrot.lane.b32.xlu0 %v930, 16
        %v1145 = vpop.permute.xlu0 %1144
        %1146 = vrot.lane.b32.xlu0 %v931, 16
        %v1147 = vpop.permute.xlu0 %1146
        %1148 = vrot.lane.b32.xlu0 %v1117, 16
        %v1149 = vpop.permute.xlu0 %1148
        %v1152 = vunpack.c.l.b16 %v747
        %v1153 = vunpack.c.l.b16 %v748
        %v1154 = vpack.c.b16 %v1153, %v1152
        %1155 = vrot.lane.b32.xlu0 %v1029, 20
        %v1156 = vpop.permute.xlu0 %1155
        %1157 = vrot.lane.b32.xlu0 %v1030, 20
        %v1158 = vpop.permute.xlu0 %1157
        %1159 = vrot.lane.b32.xlu0 %v1031, 20
        %v1160 = vpop.permute.xlu0 %1159
        %1161 = vrot.lane.b32.xlu0 %v1032, 20
        %v1162 = vpop.permute.xlu0 %1161
        %1163 = vrot.lane.b32.xlu0 %v1033, 20
        %v1164 = vpop.permute.xlu0 %1163
        %1165 = vrot.lane.b32.xlu0 %v1034, 20
        %v1166 = vpop.permute.xlu0 %1165
        %1167 = vrot.lane.b32.xlu0 %v1035, 20
        %v1168 = vpop.permute.xlu0 %1167
        %1169 = vrot.lane.b32.xlu0 %v1036, 20
        %v1170 = vpop.permute.xlu0 %1169
        %1171 = vrot.lane.b32.xlu0 %v1037, 20
        %v1172 = vpop.permute.xlu0 %1171
        %1173 = vrot.lane.b32.xlu0 %v1038, 20
        %v1174 = vpop.permute.xlu0 %1173
        %1175 = vrot.lane.b32.xlu0 %v1039, 20
        %v1176 = vpop.permute.xlu0 %1175
        %1177 = vrot.lane.b32.xlu0 %v1040, 20
        %v1178 = vpop.permute.xlu0 %1177
        %1179 = vrot.lane.b32.xlu0 %v1041, 20
        %v1180 = vpop.permute.xlu0 %1179
        %1181 = vrot.lane.b32.xlu0 %v1042, 20
        %v1182 = vpop.permute.xlu0 %1181
        %1183 = vrot.lane.b32.xlu0 %v1043, 20
        %v1184 = vpop.permute.xlu0 %1183
        %1185 = vrot.lane.b32.xlu0 %v1154, 20
        %v1186 = vpop.permute.xlu0 %1185
        %v1189 = vunpack.c.l.b16 %v749
        %v1190 = vunpack.c.l.b16 %v750
        %v1191 = vpack.c.b16 %v1190, %v1189
        %1192 = vrot.lane.b32.xlu0 %v838, 24
        %v1193 = vpop.permute.xlu0 %1192
        %1194 = vrot.lane.b32.xlu0 %v839, 24
        %v1195 = vpop.permute.xlu0 %1194
        %1196 = vrot.lane.b32.xlu0 %v840, 24
        %v1197 = vpop.permute.xlu0 %1196
        %1198 = vrot.lane.b32.xlu0 %v841, 24
        %v1199 = vpop.permute.xlu0 %1198
        %1200 = vrot.lane.b32.xlu0 %v842, 24
        %v1201 = vpop.permute.xlu0 %1200
        %1202 = vrot.lane.b32.xlu0 %v843, 24
        %v1203 = vpop.permute.xlu0 %1202
        %1204 = vrot.lane.b32.xlu0 %v844, 24
        %v1205 = vpop.permute.xlu0 %1204
        %1206 = vrot.lane.b32.xlu0 %v845, 24
        %v1207 = vpop.permute.xlu0 %1206
        %1208 = vrot.lane.b32.xlu0 %v846, 24
        %v1209 = vpop.permute.xlu0 %1208
        %1210 = vrot.lane.b32.xlu0 %v847, 24
        %v1211 = vpop.permute.xlu0 %1210
        %1212 = vrot.lane.b32.xlu0 %v848, 24
        %v1213 = vpop.permute.xlu0 %1212
        %1214 = vrot.lane.b32.xlu0 %v849, 24
        %v1215 = vpop.permute.xlu0 %1214
        %1216 = vrot.lane.b32.xlu0 %v850, 24
        %v1217 = vpop.permute.xlu0 %1216
        %1218 = vrot.lane.b32.xlu0 %v851, 24
        %v1219 = vpop.permute.xlu0 %1218
        %1220 = vrot.lane.b32.xlu0 %v1080, 24
        %v1221 = vpop.permute.xlu0 %1220
        %1222 = vrot.lane.b32.xlu0 %v1191, 24
        %v1223 = vpop.permute.xlu0 %1222
        %v1226 = vunpack.c.l.b16 %v761
        %v1227 = vunpack.c.l.b16 %v762
        %v1228 = vpack.c.b16 %v1227, %v1226
        %1229 = vrot.lane.b32.xlu0 %v918, 28
        %v1230 = vpop.permute.xlu0 %1229
        %1231 = vrot.lane.b32.xlu0 %v919, 28
        %v1232 = vpop.permute.xlu0 %1231
        %1233 = vrot.lane.b32.xlu0 %v920, 28
        %v1234 = vpop.permute.xlu0 %1233
        %1235 = vrot.lane.b32.xlu0 %v921, 28
        %v1236 = vpop.permute.xlu0 %1235
        %1237 = vrot.lane.b32.xlu0 %v922, 28
        %v1238 = vpop.permute.xlu0 %1237
        %1239 = vrot.lane.b32.xlu0 %v923, 28
        %v1240 = vpop.permute.xlu0 %1239
        %1241 = vrot.lane.b32.xlu0 %v924, 28
        %v1242 = vpop.permute.xlu0 %1241
        %1243 = vrot.lane.b32.xlu0 %v925, 28
        %v1244 = vpop.permute.xlu0 %1243
        %1245 = vrot.lane.b32.xlu0 %v926, 28
        %v1246 = vpop.permute.xlu0 %1245
        %1247 = vrot.lane.b32.xlu0 %v927, 28
        %v1248 = vpop.permute.xlu0 %1247
        %1249 = vrot.lane.b32.xlu0 %v928, 28
        %v1250 = vpop.permute.xlu0 %1249
        %1251 = vrot.lane.b32.xlu0 %v929, 28
        %v1252 = vpop.permute.xlu0 %1251
        %1253 = vrot.lane.b32.xlu0 %v930, 28
        %v1254 = vpop.permute.xlu0 %1253
        %1255 = vrot.lane.b32.xlu0 %v931, 28
        %v1256 = vpop.permute.xlu0 %1255
        %1257 = vrot.lane.b32.xlu0 %v1117, 28
        %v1258 = vpop.permute.xlu0 %1257
        %1259 = vrot.lane.b32.xlu0 %v1228, 28
        %v1260 = vpop.permute.xlu0 %1259
        %v1263 = vunpack.c.l.b16 %v770
        %v1264 = vunpack.c.l.b16 %v771
        %v1265 = vpack.c.b16 %v1264, %v1263
        %1266 = vrot.lane.b32.xlu0 %v1030, 32
        %v1267 = vpop.permute.xlu0 %1266
        %1268 = vrot.lane.b32.xlu0 %v1031, 32
        %v1269 = vpop.permute.xlu0 %1268
        %1270 = vrot.lane.b32.xlu0 %v1032, 32
        %v1271 = vpop.permute.xlu0 %1270
        %1272 = vrot.lane.b32.xlu0 %v1033, 32
        %v1273 = vpop.permute.xlu0 %1272
        %1274 = vrot.lane.b32.xlu0 %v1034, 32
        %v1275 = vpop.permute.xlu0 %1274
        %1276 = vrot.lane.b32.xlu0 %v1035, 32
        %v1277 = vpop.permute.xlu0 %1276
        %1278 = vrot.lane.b32.xlu0 %v1036, 32
        %v1279 = vpop.permute.xlu0 %1278
        %1280 = vrot.lane.b32.xlu0 %v1037, 32
        %v1281 = vpop.permute.xlu0 %1280
        %1282 = vrot.lane.b32.xlu0 %v1038, 32
        %v1283 = vpop.permute.xlu0 %1282
        %1284 = vrot.lane.b32.xlu0 %v1039, 32
        %v1285 = vpop.permute.xlu0 %1284
        %1286 = vrot.lane.b32.xlu0 %v1040, 32
        %v1287 = vpop.permute.xlu0 %1286
        %1288 = vrot.lane.b32.xlu0 %v1041, 32
        %v1289 = vpop.permute.xlu0 %1288
        %1290 = vrot.lane.b32.xlu0 %v1042, 32
        %v1291 = vpop.permute.xlu0 %1290
        %1292 = vrot.lane.b32.xlu0 %v1043, 32
        %v1293 = vpop.permute.xlu0 %1292
        %1294 = vrot.lane.b32.xlu0 %v1154, 32
        %v1295 = vpop.permute.xlu0 %1294
        %1296 = vrot.lane.b32.xlu0 %v1265, 32
        %v1297 = vpop.permute.xlu0 %1296
        %vm1298 = vcmask 31744
        %v1301 = vsel %vm1298, %v836, %v933
        %v1304 = vsel %vm1298, %v837, %v935
        %v1307 = vsel %vm1298, %v838, %v937
        %v1310 = vsel %vm1298, %v839, %v939
        %v1313 = vsel %vm1298, %v840, %v941
        %v1316 = vsel %vm1298, %v841, %v943
        %v1319 = vsel %vm1298, %v842, %v945
        %v1322 = vsel %vm1298, %v843, %v947
        %v1325 = vsel %vm1298, %v844, %v949
        %v1328 = vsel %vm1298, %v845, %v951
        %v1331 = vsel %vm1298, %v846, %v953
        %v1334 = vsel %vm1298, %v847, %v955
        %v1337 = vsel %vm1298, %v848, %v957
        %v1340 = vsel %vm1298, %v849, %v959
        %v1343 = vsel %vm1298, %v850, %v961
        %v1346 = vsel %vm1298, %v851, %v963
        %vm1347 = vcmask 64512
        %v1349 = vsel %vm1347, %v1301, %v1045
        %v1351 = vsel %vm1347, %v1304, %v1047
        %v1353 = vsel %vm1347, %v1307, %v1049
        %v1355 = vsel %vm1347, %v1310, %v1051
        %v1357 = vsel %vm1347, %v1313, %v1053
        %v1359 = vsel %vm1347, %v1316, %v1055
        %v1361 = vsel %vm1347, %v1319, %v1057
        %v1363 = vsel %vm1347, %v1322, %v1059
        %v1365 = vsel %vm1347, %v1325, %v1061
        %v1367 = vsel %vm1347, %v1328, %v1063
        %v1369 = vsel %vm1347, %v1331, %v1065
        %v1371 = vsel %vm1347, %v1334, %v1067
        %v1373 = vsel %vm1347, %v1337, %v1069
        %v1375 = vsel %vm1347, %v1340, %v1071
        %v1377 = vsel %vm1347, %v1343, %v1073
        %v1379 = vsel %vm1347, %v1346, %v1075
        %vm1380 = vcmask 97280
        %v1382 = vsel %vm1380, %v1349, %v1082
        %v1384 = vsel %vm1380, %v1351, %v1084
        %v1386 = vsel %vm1380, %v1353, %v1086
        %v1388 = vsel %vm1380, %v1355, %v1088
        %v1390 = vsel %vm1380, %v1357, %v1090
        %v1392 = vsel %vm1380, %v1359, %v1092
        %v1394 = vsel %vm1380, %v1361, %v1094
        %v1396 = vsel %vm1380, %v1363, %v1096
        %v1398 = vsel %vm1380, %v1365, %v1098
        %v1400 = vsel %vm1380, %v1367, %v1100
        %v1402 = vsel %vm1380, %v1369, %v1102
        %v1404 = vsel %vm1380, %v1371, %v1104
        %v1406 = vsel %vm1380, %v1373, %v1106
        %v1408 = vsel %vm1380, %v1375, %v1108
        %v1410 = vsel %vm1380, %v1377, %v1110
        %v1412 = vsel %vm1380, %v1379, %v1112
        %vm1413 = vcmask 130048
        %v1415 = vsel %vm1413, %v1382, %v1119
        %v1417 = vsel %vm1413, %v1384, %v1121
        %v1419 = vsel %vm1413, %v1386, %v1123
        %v1421 = vsel %vm1413, %v1388, %v1125
        %v1423 = vsel %vm1413, %v1390, %v1127
        %v1425 = vsel %vm1413, %v1392, %v1129
        %v1427 = vsel %vm1413, %v1394, %v1131
        %v1429 = vsel %vm1413, %v1396, %v1133
        %v1431 = vsel %vm1413, %v1398, %v1135
        %v1433 = vsel %vm1413, %v1400, %v1137
        %v1435 = vsel %vm1413, %v1402, %v1139
        %v1437 = vsel %vm1413, %v1404, %v1141
        %v1439 = vsel %vm1413, %v1406, %v1143
        %v1441 = vsel %vm1413, %v1408, %v1145
        %v1443 = vsel %vm1413, %v1410, %v1147
        %v1445 = vsel %vm1413, %v1412, %v1149
        %vm1446 = vcmask 162816
        %v1448 = vsel %vm1446, %v1415, %v1156
        %v1450 = vsel %vm1446, %v1417, %v1158
        %v1452 = vsel %vm1446, %v1419, %v1160
        %v1454 = vsel %vm1446, %v1421, %v1162
        %v1456 = vsel %vm1446, %v1423, %v1164
        %v1458 = vsel %vm1446, %v1425, %v1166
        %v1460 = vsel %vm1446, %v1427, %v1168
        %v1462 = vsel %vm1446, %v1429, %v1170
        %v1464 = vsel %vm1446, %v1431, %v1172
        %v1466 = vsel %vm1446, %v1433, %v1174
        %v1468 = vsel %vm1446, %v1435, %v1176
        %v1470 = vsel %vm1446, %v1437, %v1178
        %v1472 = vsel %vm1446, %v1439, %v1180
        %v1474 = vsel %vm1446, %v1441, %v1182
        %v1476 = vsel %vm1446, %v1443, %v1184
        %v1478 = vsel %vm1446, %v1445, %v1186
        %vm1479 = vcmask 195584
        %v1481 = vsel %vm1479, %v1448, %v1193
        %v1483 = vsel %vm1479, %v1450, %v1195
        %v1485 = vsel %vm1479, %v1452, %v1197
        %v1487 = vsel %vm1479, %v1454, %v1199
        %v1489 = vsel %vm1479, %v1456, %v1201
        %v1491 = vsel %vm1479, %v1458, %v1203
        %v1493 = vsel %vm1479, %v1460, %v1205
        %v1495 = vsel %vm1479, %v1462, %v1207
        %v1497 = vsel %vm1479, %v1464, %v1209
        %v1499 = vsel %vm1479, %v1466, %v1211
        %v1501 = vsel %vm1479, %v1468, %v1213
        %v1503 = vsel %vm1479, %v1470, %v1215
        %v1505 = vsel %vm1479, %v1472, %v1217
        %v1507 = vsel %vm1479, %v1474, %v1219
        %v1509 = vsel %vm1479, %v1476, %v1221
        %v1511 = vsel %vm1479, %v1478, %v1223
        %vm1512 = vcmask 228352
        %v1514 = vsel %vm1512, %v1481, %v1230
        %v1516 = vsel %vm1512, %v1483, %v1232
        %v1518 = vsel %vm1512, %v1485, %v1234
        %v1520 = vsel %vm1512, %v1487, %v1236
        %v1522 = vsel %vm1512, %v1489, %v1238
        %v1524 = vsel %vm1512, %v1491, %v1240
        %v1526 = vsel %vm1512, %v1493, %v1242
        %v1528 = vsel %vm1512, %v1495, %v1244
        %v1530 = vsel %vm1512, %v1497, %v1246
        %v1532 = vsel %vm1512, %v1499, %v1248
        %v1534 = vsel %vm1512, %v1501, %v1250
        %v1536 = vsel %vm1512, %v1503, %v1252
        %v1538 = vsel %vm1512, %v1505, %v1254
        %v1540 = vsel %vm1512, %v1507, %v1256
        %v1542 = vsel %vm1512, %v1509, %v1258
        %v1544 = vsel %vm1512, %v1511, %v1260
        %vm1545 = vcmask 261120
        %v1547 = vsel %vm1545, %v1514, %v1267
        %v1549 = vsel %vm1545, %v1516, %v1269
        %v1551 = vsel %vm1545, %v1518, %v1271
        %v1553 = vsel %vm1545, %v1520, %v1273
        %v1555 = vsel %vm1545, %v1522, %v1275
        %v1557 = vsel %vm1545, %v1524, %v1277
        %v1559 = vsel %vm1545, %v1526, %v1279
        %v1561 = vsel %vm1545, %v1528, %v1281
        %v1563 = vsel %vm1545, %v1530, %v1283
        %v1565 = vsel %vm1545, %v1532, %v1285
        %v1567 = vsel %vm1545, %v1534, %v1287
        %v1569 = vsel %vm1545, %v1536, %v1289
        %v1571 = vsel %vm1545, %v1538, %v1291
        %v1573 = vsel %vm1545, %v1540, %v1293
        %v1575 = vsel %vm1545, %v1542, %v1295
        %v1577 = vsel %vm1545, %v1544, %v1297
        %v1578 = vld [vmem:[%s2] sm:$0xf]
        %v1579 = vld [vmem:[%s2 + $0x4] sm:$0xf]
        %v1580 = vld [vmem:[%s2 + $0x8] sm:$0xf]
        %v1581 = vld [vmem:[%s2 + $0xc] sm:$0xf]
        %v1582 = vld [vmem:[%s2 + $0x10] sm:$0x3]
        %v1583 = vpack.c.bf16 %v336, %v336
        %v1584 = vpack.c.bf16 %v338, %v338
        %v1585 = vpack.c.bf16 %v340, %v340
        %v1586 = vpack.c.bf16 %v342, %v342
        %v1587 = vpack.c.bf16 %v344, %v344
        %v1588 = vpack.c.bf16 %v346, %v346
        %v1589 = vpack.c.bf16 %v348, %v348
        %v1590 = vpack.c.bf16 %v350, %v350
        %v1607 = vrot.slane %v336, 1
        %v1608 = vrot.slane %v337, 1
        %v1609 = vsel %vm436, %v1607, %v1608
        %v1610 = vrot.slane %v338, 1
        %v1611 = vrot.slane %v339, 1
        %v1612 = vsel %vm436, %v1610, %v1611
        %v1613 = vrot.slane %v340, 1
        %v1614 = vrot.slane %v341, 1
        %v1615 = vsel %vm436, %v1613, %v1614
        %v1616 = vrot.slane %v342, 1
        %v1617 = vrot.slane %v343, 1
        %v1618 = vsel %vm436, %v1616, %v1617
        %v1619 = vrot.slane %v344, 1
        %v1620 = vrot.slane %v345, 1
        %v1621 = vsel %vm436, %v1619, %v1620
        %v1622 = vrot.slane %v346, 1
        %v1623 = vrot.slane %v347, 1
        %v1624 = vsel %vm436, %v1622, %v1623
        %v1625 = vrot.slane %v348, 1
        %v1626 = vrot.slane %v349, 1
        %v1627 = vsel %vm436, %v1625, %v1626
        %v1628 = vrot.slane %v350, 1
        %v1629 = vrot.slane %v351, 1
        %v1630 = vsel %vm436, %v1628, %v1629
        %v1639 = vpack.c.bf16 %v1609, %v1609
        %v1640 = vpack.c.bf16 %v1612, %v1612
        %v1641 = vpack.c.bf16 %v1615, %v1615
        %v1642 = vpack.c.bf16 %v1618, %v1618
        %v1643 = vpack.c.bf16 %v1621, %v1621
        %v1644 = vpack.c.bf16 %v1624, %v1624
        %v1645 = vpack.c.bf16 %v1627, %v1627
        %v1646 = vpack.c.bf16 %v1630, %v1630
        %v1647 = vrot.slane %v336, 2
        %v1648 = vrot.slane %v337, 2
        %v1649 = vsel %vm581, %v1647, %v1648
        %v1650 = vrot.slane %v338, 2
        %v1651 = vrot.slane %v339, 2
        %v1652 = vsel %vm581, %v1650, %v1651
        %v1653 = vrot.slane %v340, 2
        %v1654 = vrot.slane %v341, 2
        %v1655 = vsel %vm581, %v1653, %v1654
        %v1656 = vrot.slane %v342, 2
        %v1657 = vrot.slane %v343, 2
        %v1658 = vsel %vm581, %v1656, %v1657
        %v1659 = vrot.slane %v344, 2
        %v1660 = vrot.slane %v345, 2
        %v1661 = vsel %vm581, %v1659, %v1660
        %v1662 = vrot.slane %v346, 2
        %v1663 = vrot.slane %v347, 2
        %v1664 = vsel %vm581, %v1662, %v1663
        %v1665 = vrot.slane %v348, 2
        %v1666 = vrot.slane %v349, 2
        %v1667 = vsel %vm581, %v1665, %v1666
        %v1668 = vrot.slane %v350, 2
        %v1669 = vrot.slane %v351, 2
        %v1670 = vsel %vm581, %v1668, %v1669
        %v1679 = vpack.c.bf16 %v1649, %v1649
        %v1680 = vpack.c.bf16 %v1652, %v1652
        %v1681 = vpack.c.bf16 %v1655, %v1655
        %v1682 = vpack.c.bf16 %v1658, %v1658
        %v1683 = vpack.c.bf16 %v1661, %v1661
        %v1684 = vpack.c.bf16 %v1664, %v1664
        %v1685 = vpack.c.bf16 %v1667, %v1667
        %v1686 = vpack.c.bf16 %v1670, %v1670
        %v1687 = vpack.c.bf16 %v352, %v352
        %v1690 = vrot.slane %v352, 1
        %v1691 = vrot.slane %v353, 1
        %v1692 = vsel %vm436, %v1690, %v1691
        %v1694 = vpack.c.bf16 %v1692, %v1692
        %v1695 = vrot.slane %v352, 2
        %v1696 = vrot.slane %v353, 2
        %v1697 = vsel %vm581, %v1695, %v1696
        %v1699 = vpack.c.bf16 %v1697, %v1697
        %v1700 = vpack.c.bf16 %v354, %v354
        %v1703 = vrot.slane %v354, 1
        %v1704 = vrot.slane %v355, 1
        %v1705 = vsel %vm436, %v1703, %v1704
        %v1707 = vpack.c.bf16 %v1705, %v1705
        %v1708 = vrot.slane %v354, 2
        %v1709 = vrot.slane %v355, 2
        %v1710 = vsel %vm581, %v1708, %v1709
        %v1712 = vpack.c.bf16 %v1710, %v1710
        %v1721 = vunpack.c.l.b16 %v1583
        %v1722 = vunpack.c.l.b16 %v1584
        %v1723 = vunpack.c.l.b16 %v1585
        %v1724 = vunpack.c.l.b16 %v1586
        %v1725 = vunpack.c.l.b16 %v1587
        %v1726 = vunpack.c.l.b16 %v1588
        %v1727 = vunpack.c.l.b16 %v1589
        %v1728 = vunpack.c.l.b16 %v1590
        %v1729 = vpack.c.b16 %v1722, %v1721
        %v1730 = vpack.c.b16 %v1724, %v1723
        %v1731 = vpack.c.b16 %v1726, %v1725
        %v1732 = vpack.c.b16 %v1728, %v1727
        %v1741 = vunpack.c.l.b16 %v1639
        %v1742 = vunpack.c.l.b16 %v1640
        %v1743 = vunpack.c.l.b16 %v1641
        %v1744 = vunpack.c.l.b16 %v1642
        %v1745 = vunpack.c.l.b16 %v1643
        %v1746 = vunpack.c.l.b16 %v1644
        %v1747 = vunpack.c.l.b16 %v1645
        %v1748 = vunpack.c.l.b16 %v1646
        %v1749 = vpack.c.b16 %v1742, %v1741
        %v1750 = vpack.c.b16 %v1744, %v1743
        %v1751 = vpack.c.b16 %v1746, %v1745
        %v1752 = vpack.c.b16 %v1748, %v1747
        %1753 = vrot.lane.b32.xlu0 %v1749, 4
        %v1754 = vpop.permute.xlu0 %1753
        %1755 = vrot.lane.b32.xlu0 %v1750, 4
        %v1756 = vpop.permute.xlu0 %1755
        %1757 = vrot.lane.b32.xlu0 %v1751, 4
        %v1758 = vpop.permute.xlu0 %1757
        %1759 = vrot.lane.b32.xlu0 %v1752, 4
        %v1760 = vpop.permute.xlu0 %1759
        %v1769 = vunpack.c.l.b16 %v1679
        %v1770 = vunpack.c.l.b16 %v1680
        %v1771 = vunpack.c.l.b16 %v1681
        %v1772 = vunpack.c.l.b16 %v1682
        %v1773 = vunpack.c.l.b16 %v1683
        %v1774 = vunpack.c.l.b16 %v1684
        %v1775 = vunpack.c.l.b16 %v1685
        %v1776 = vunpack.c.l.b16 %v1686
        %v1777 = vpack.c.b16 %v1770, %v1769
        %v1778 = vpack.c.b16 %v1772, %v1771
        %v1779 = vpack.c.b16 %v1774, %v1773
        %v1780 = vpack.c.b16 %v1776, %v1775
        %1781 = vrot.lane.b32.xlu0 %v1777, 8
        %v1782 = vpop.permute.xlu0 %1781
        %1783 = vrot.lane.b32.xlu0 %v1778, 8
        %v1784 = vpop.permute.xlu0 %1783
        %1785 = vrot.lane.b32.xlu0 %v1779, 8
        %v1786 = vpop.permute.xlu0 %1785
        %1787 = vrot.lane.b32.xlu0 %v1780, 8
        %v1788 = vpop.permute.xlu0 %1787
        %v1790 = vunpack.c.l.b16 %v1687
        %v1791 = vpack.c.b16 %v1723, %v1722
        %v1792 = vpack.c.b16 %v1725, %v1724
        %v1793 = vpack.c.b16 %v1727, %v1726
        %v1794 = vpack.c.b16 %v1790, %v1728
        %1795 = vrot.lane.b32.xlu0 %v1791, 12
        %v1796 = vpop.permute.xlu0 %1795
        %1797 = vrot.lane.b32.xlu0 %v1792, 12
        %v1798 = vpop.permute.xlu0 %1797
        %1799 = vrot.lane.b32.xlu0 %v1793, 12
        %v1800 = vpop.permute.xlu0 %1799
        %1801 = vrot.lane.b32.xlu0 %v1794, 12
        %v1802 = vpop.permute.xlu0 %1801
        %v1804 = vunpack.c.l.b16 %v1694
        %v1805 = vpack.c.b16 %v1743, %v1742
        %v1806 = vpack.c.b16 %v1745, %v1744
        %v1807 = vpack.c.b16 %v1747, %v1746
        %v1808 = vpack.c.b16 %v1804, %v1748
        %1809 = vrot.lane.b32.xlu0 %v1805, 16
        %v1810 = vpop.permute.xlu0 %1809
        %1811 = vrot.lane.b32.xlu0 %v1806, 16
        %v1812 = vpop.permute.xlu0 %1811
        %1813 = vrot.lane.b32.xlu0 %v1807, 16
        %v1814 = vpop.permute.xlu0 %1813
        %1815 = vrot.lane.b32.xlu0 %v1808, 16
        %v1816 = vpop.permute.xlu0 %1815
        %v1818 = vunpack.c.l.b16 %v1699
        %v1819 = vpack.c.b16 %v1771, %v1770
        %v1820 = vpack.c.b16 %v1773, %v1772
        %v1821 = vpack.c.b16 %v1775, %v1774
        %v1822 = vpack.c.b16 %v1818, %v1776
        %1823 = vrot.lane.b32.xlu0 %v1819, 20
        %v1824 = vpop.permute.xlu0 %1823
        %1825 = vrot.lane.b32.xlu0 %v1820, 20
        %v1826 = vpop.permute.xlu0 %1825
        %1827 = vrot.lane.b32.xlu0 %v1821, 20
        %v1828 = vpop.permute.xlu0 %1827
        %1829 = vrot.lane.b32.xlu0 %v1822, 20
        %v1830 = vpop.permute.xlu0 %1829
        %v1832 = vunpack.c.l.b16 %v1700
        %v1833 = vpack.c.b16 %v1832, %v1790
        %1834 = vrot.lane.b32.xlu0 %v1730, 24
        %v1835 = vpop.permute.xlu0 %1834
        %1836 = vrot.lane.b32.xlu0 %v1731, 24
        %v1837 = vpop.permute.xlu0 %1836
        %1838 = vrot.lane.b32.xlu0 %v1732, 24
        %v1839 = vpop.permute.xlu0 %1838
        %1840 = vrot.lane.b32.xlu0 %v1833, 24
        %v1841 = vpop.permute.xlu0 %1840
        %v1843 = vunpack.c.l.b16 %v1707
        %v1844 = vpack.c.b16 %v1843, %v1804
        %1845 = vrot.lane.b32.xlu0 %v1750, 28
        %v1846 = vpop.permute.xlu0 %1845
        %1847 = vrot.lane.b32.xlu0 %v1751, 28
        %v1848 = vpop.permute.xlu0 %1847
        %1849 = vrot.lane.b32.xlu0 %v1752, 28
        %v1850 = vpop.permute.xlu0 %1849
        %1851 = vrot.lane.b32.xlu0 %v1844, 28
        %v1852 = vpop.permute.xlu0 %1851
        %v1854 = vunpack.c.l.b16 %v1712
        %v1855 = vpack.c.b16 %v1854, %v1818
        %1856 = vrot.lane.b32.xlu0 %v1778, 32
        %v1857 = vpop.permute.xlu0 %1856
        %1858 = vrot.lane.b32.xlu0 %v1779, 32
        %v1859 = vpop.permute.xlu0 %1858
        %1860 = vrot.lane.b32.xlu0 %v1780, 32
        %v1861 = vpop.permute.xlu0 %1860
        %1862 = vrot.lane.b32.xlu0 %v1855, 32
        %v1863 = vpop.permute.xlu0 %1862
        %v1866 = vsel %vm1298, %v1729, %v1754
        %v1869 = vsel %vm1298, %v1730, %v1756
        %v1872 = vsel %vm1298, %v1731, %v1758
        %v1875 = vsel %vm1298, %v1732, %v1760
        %v1877 = vsel %vm1347, %v1866, %v1782
        %v1879 = vsel %vm1347, %v1869, %v1784
        %v1881 = vsel %vm1347, %v1872, %v1786
        %v1883 = vsel %vm1347, %v1875, %v1788
        %v1885 = vsel %vm1380, %v1877, %v1796
        %v1887 = vsel %vm1380, %v1879, %v1798
        %v1889 = vsel %vm1380, %v1881, %v1800
        %v1891 = vsel %vm1380, %v1883, %v1802
        %v1893 = vsel %vm1413, %v1885, %v1810
        %v1895 = vsel %vm1413, %v1887, %v1812
        %v1897 = vsel %vm1413, %v1889, %v1814
        %v1899 = vsel %vm1413, %v1891, %v1816
        %v1901 = vsel %vm1446, %v1893, %v1824
        %v1903 = vsel %vm1446, %v1895, %v1826
        %v1905 = vsel %vm1446, %v1897, %v1828
        %v1907 = vsel %vm1446, %v1899, %v1830
        %v1909 = vsel %vm1479, %v1901, %v1835
        %v1911 = vsel %vm1479, %v1903, %v1837
        %v1913 = vsel %vm1479, %v1905, %v1839
        %v1915 = vsel %vm1479, %v1907, %v1841
        %v1917 = vsel %vm1512, %v1909, %v1846
        %v1919 = vsel %vm1512, %v1911, %v1848
        %v1921 = vsel %vm1512, %v1913, %v1850
        %v1923 = vsel %vm1512, %v1915, %v1852
        %v1925 = vsel %vm1545, %v1917, %v1857
        %v1927 = vsel %vm1545, %v1919, %v1859
        %v1929 = vsel %vm1545, %v1921, %v1861
        %v1931 = vsel %vm1545, %v1923, %v1863
        %v1932 = vld [vmem:[%s3] sm:$0xf]
        %v1933 = vld [vmem:[%s3 + $0x4] sm:$0xf]
        %v1934 = vld [vmem:[%s3 + $0x8] sm:$0xf]
        %v1935 = vld [vmem:[%s3 + $0xc] sm:$0xf]
        %v1936 = vld [vmem:[%s3 + $0x10] sm:$0x3]
        %v1942 = vunpack.c.l.b16 %v1932
        %v1943 = vunpack.c.l.b16 %v1933
        %v1944 = vunpack.c.l.b16 %v1934
        %v1945 = vunpack.c.l.b16 %v1935
        %v1946 = vunpack.c.l.b16 %v1936
        %v1947 = vpack.c.b16 %v1943, %v1942
        %v1948 = vpack.c.b16 %v1945, %v1944
        %v1949 = vpack.c.b16 %v1946, %v1946
        %vm1952 = vcmask 293888
        %v1953 = vsel %vm1952, %v1925, 0
        %v1955 = vsel %vm1952, %v1927, 0
        %v1957 = vsel %vm1952, %v1929, 0
        %v1959 = vsel %vm1952, %v1931, 0
        %vm1961 = vcmask 1041408
        %v1963 = vsel %vm1961, %v1949, 0
        %1965 = vmatpush.bf16.msra.mxu0 0
        %1966 = vmatpush.bf16.msra.mxu0 0
        %1967 = vmatpush.bf16.msra.mxu0 0
        %1968 = vmatpush.bf16.msra.mxu0 0
        %1969 = vmatpush.bf16.msra.mxu0 0
        %1970 = vmatpush.bf16.msra.mxu0 %v1963
        %1971 = vmatpush.bf16.msra.mxu0 %v1948
        %1972 = vmatpush.bf16.msra.mxu0 %v1947
        %1973 = vmatmul.bf16.gmra.mxu0 %v1953
        %v1974 = vpop.f32.mrf.mxu0
        %v1975 = vadd.f32 0.0, %v1974
        %v1976 = vpop.f32.mrf.mxu0
        %v1977 = vadd.f32 0.0, %v1976
        %1978 = vmatmul.bf16.gmra.mxu0 %v1955
        %v1979 = vpop.f32.mrf.mxu0
        %v1980 = vadd.f32 0.0, %v1979
        %v1981 = vpop.f32.mrf.mxu0
        %v1982 = vadd.f32 0.0, %v1981
        %1983 = vmatmul.bf16.gmra.mxu0 %v1957
        %v1984 = vpop.f32.mrf.mxu0
        %v1985 = vadd.f32 0.0, %v1984
        %v1986 = vpop.f32.mrf.mxu0
        %v1987 = vadd.f32 0.0, %v1986
        %1988 = vmatmul.bf16.gmra.mxu0 %v1959
        %v1989 = vpop.f32.mrf.mxu0
        %v1990 = vadd.f32 0.0, %v1989
        %v1991 = vpop.f32.mrf.mxu0
        %v1992 = vadd.f32 0.0, %v1991
        %1993 = vdwg.mxu0
        %v1994 = vld [vmem:[%s4] sm:$0xff]
        %v1995 = vld [vmem:[%s4 + $0x8] sm:$0xff]
        %v1996 = vld [vmem:[%s4 + $0x10] sm:$0xff]
        %v1997 = vld [vmem:[%s4 + $0x18] sm:$0xff]
        %v1998 = vld [vmem:[%s4 + $0x20] sm:$0xff]
        %v1999 = vld [vmem:[%s4 + $0x28] sm:$0xff]
        %v2000 = vld [vmem:[%s4 + $0x30] sm:$0xff]
        %v2001 = vld [vmem:[%s4 + $0x38] sm:$0xff]
        %v2002 = vld [vmem:[%s4 + $0x40] sm:$0xff]
        %v2003 = vld [vmem:[%s4 + $0x48] sm:$0xff]
        %v2004 = vld [vmem:[%s4 + $0x50] sm:$0xff]
        %v2005 = vld [vmem:[%s4 + $0x58] sm:$0xff]
        %v2006 = vld [vmem:[%s4 + $0x60] sm:$0xff]
        %v2007 = vld [vmem:[%s4 + $0x68] sm:$0xff]
        %v2008 = vld [vmem:[%s4 + $0x70] sm:$0xff]
        %v2009 = vld [vmem:[%s4 + $0x78] sm:$0xff]
        %v2011 = vsel %vm1347, %v1994, 0
        %v2014 = vsel %vm1347, %v1995, 0
        %2016 = vmatpush.msra.mxu0 0.0
        %2017 = vmatpush.msra.mxu0 0.0
        %2018 = vmatpush.msra.mxu0 0.0
        %2019 = vmatpush.msra.mxu0 0.0
        %2020 = vmatpush.msra.mxu0 0.0
        %2021 = vmatpush.msra.mxu0 0.0
        %2022 = vmatpush.msra.mxu0 0.0
        %2023 = vmatpush.msra.mxu0 0.0
        %2024 = vmatpush.msra.mxu0 0.0
        %2025 = vmatpush.msra.mxu0 0.0
        %2026 = vmatpush.msra.mxu0 0.0
        %2027 = vmatpush.msra.mxu0 0.0
        %2028 = vmatpush.msra.mxu0 0.0
        %2029 = vmatpush.msra.mxu0 0.0
        %2030 = vmatpush.msra.mxu0 0.0
        %2031 = vmatpush.msra.mxu0 %v1975
        %2032 = vmatmul.f32.gmra.mxu0 %v2011
        %v2033 = vpop.f32.mrf.mxu0
        %v2034 = vadd.f32 0.0, %v2033
        %2035 = vmatmul.f32.gmra.mxu0 %v2014
        %v2036 = vpop.f32.mrf.mxu0
        %v2037 = vadd.f32 0.0, %v2036
        %2038 = vdwg.mxu0
        %v2040 = vsel %vm1347, %v1996, 0
        %v2043 = vsel %vm1347, %v1997, 0
        %2045 = vmatpush.msra.mxu0 0.0
        %2046 = vmatpush.msra.mxu0 0.0
        %2047 = vmatpush.msra.mxu0 0.0
        %2048 = vmatpush.msra.mxu0 0.0
        %2049 = vmatpush.msra.mxu0 0.0
        %2050 = vmatpush.msra.mxu0 0.0
        %2051 = vmatpush.msra.mxu0 0.0
        %2052 = vmatpush.msra.mxu0 0.0
        %2053 = vmatpush.msra.mxu0 0.0
        %2054 = vmatpush.msra.mxu0 0.0
        %2055 = vmatpush.msra.mxu0 0.0
        %2056 = vmatpush.msra.mxu0 0.0
        %2057 = vmatpush.msra.mxu0 0.0
        %2058 = vmatpush.msra.mxu0 0.0
        %2059 = vmatpush.msra.mxu0 0.0
        %2060 = vmatpush.msra.mxu0 %v1977
        %2061 = vmatmul.f32.gmra.mxu0 %v2040
        %v2062 = vpop.f32.mrf.mxu0
        %v2063 = vadd.f32 0.0, %v2062
        %2064 = vmatmul.f32.gmra.mxu0 %v2043
        %v2065 = vpop.f32.mrf.mxu0
        %v2066 = vadd.f32 0.0, %v2065
        %2067 = vdwg.mxu0
        %v2069 = vsel %vm1347, %v1998, 0
        %v2072 = vsel %vm1347, %v1999, 0
        %2074 = vmatpush.msra.mxu0 0.0
        %2075 = vmatpush.msra.mxu0 0.0
        %2076 = vmatpush.msra.mxu0 0.0
        %2077 = vmatpush.msra.mxu0 0.0
        %2078 = vmatpush.msra.mxu0 0.0
        %2079 = vmatpush.msra.mxu0 0.0
        %2080 = vmatpush.msra.mxu0 0.0
        %2081 = vmatpush.msra.mxu0 0.0
        %2082 = vmatpush.msra.mxu0 0.0
        %2083 = vmatpush.msra.mxu0 0.0
        %2084 = vmatpush.msra.mxu0 0.0
        %2085 = vmatpush.msra.mxu0 0.0
        %2086 = vmatpush.msra.mxu0 0.0
        %2087 = vmatpush.msra.mxu0 0.0
        %2088 = vmatpush.msra.mxu0 0.0
        %2089 = vmatpush.msra.mxu0 %v1980
        %2090 = vmatmul.f32.gmra.mxu0 %v2069
        %v2091 = vpop.f32.mrf.mxu0
        %v2092 = vadd.f32 0.0, %v2091
        %2093 = vmatmul.f32.gmra.mxu0 %v2072
        %v2094 = vpop.f32.mrf.mxu0
        %v2095 = vadd.f32 0.0, %v2094
        %2096 = vdwg.mxu0
        %v2098 = vsel %vm1347, %v2000, 0
        %v2101 = vsel %vm1347, %v2001, 0
        %2103 = vmatpush.msra.mxu0 0.0
        %2104 = vmatpush.msra.mxu0 0.0
        %2105 = vmatpush.msra.mxu0 0.0
        %2106 = vmatpush.msra.mxu0 0.0
        %2107 = vmatpush.msra.mxu0 0.0
        %2108 = vmatpush.msra.mxu0 0.0
        %2109 = vmatpush.msra.mxu0 0.0
        %2110 = vmatpush.msra.mxu0 0.0
        %2111 = vmatpush.msra.mxu0 0.0
        %2112 = vmatpush.msra.mxu0 0.0
        %2113 = vmatpush.msra.mxu0 0.0
        %2114 = vmatpush.msra.mxu0 0.0
        %2115 = vmatpush.msra.mxu0 0.0
        %2116 = vmatpush.msra.mxu0 0.0
        %2117 = vmatpush.msra.mxu0 0.0
        %2118 = vmatpush.msra.mxu0 %v1982
        %2119 = vmatmul.f32.gmra.mxu0 %v2098
        %v2120 = vpop.f32.mrf.mxu0
        %v2121 = vadd.f32 0.0, %v2120
        %2122 = vmatmul.f32.gmra.mxu0 %v2101
        %v2123 = vpop.f32.mrf.mxu0
        %v2124 = vadd.f32 0.0, %v2123
        %2125 = vdwg.mxu0
        %v2127 = vsel %vm1347, %v2002, 0
        %v2130 = vsel %vm1347, %v2003, 0
        %2132 = vmatpush.msra.mxu0 0.0
        %2133 = vmatpush.msra.mxu0 0.0
        %2134 = vmatpush.msra.mxu0 0.0
        %2135 = vmatpush.msra.mxu0 0.0
        %2136 = vmatpush.msra.mxu0 0.0
        %2137 = vmatpush.msra.mxu0 0.0
        %2138 = vmatpush.msra.mxu0 0.0
        %2139 = vmatpush.msra.mxu0 0.0
        %2140 = vmatpush.msra.mxu0 0.0
        %2141 = vmatpush.msra.mxu0 0.0
        %2142 = vmatpush.msra.mxu0 0.0
        %2143 = vmatpush.msra.mxu0 0.0
        %2144 = vmatpush.msra.mxu0 0.0
        %2145 = vmatpush.msra.mxu0 0.0
        %2146 = vmatpush.msra.mxu0 0.0
        %2147 = vmatpush.msra.mxu0 %v1985
        %2148 = vmatmul.f32.gmra.mxu0 %v2127
        %v2149 = vpop.f32.mrf.mxu0
        %v2150 = vadd.f32 0.0, %v2149
        %2151 = vmatmul.f32.gmra.mxu0 %v2130
        %v2152 = vpop.f32.mrf.mxu0
        %v2153 = vadd.f32 0.0, %v2152
        %2154 = vdwg.mxu0
        %v2156 = vsel %vm1347, %v2004, 0
        %v2159 = vsel %vm1347, %v2005, 0
        %2161 = vmatpush.msra.mxu0 0.0
        %2162 = vmatpush.msra.mxu0 0.0
        %2163 = vmatpush.msra.mxu0 0.0
        %2164 = vmatpush.msra.mxu0 0.0
        %2165 = vmatpush.msra.mxu0 0.0
        %2166 = vmatpush.msra.mxu0 0.0
        %2167 = vmatpush.msra.mxu0 0.0
        %2168 = vmatpush.msra.mxu0 0.0
        %2169 = vmatpush.msra.mxu0 0.0
        %2170 = vmatpush.msra.mxu0 0.0
        %2171 = vmatpush.msra.mxu0 0.0
        %2172 = vmatpush.msra.mxu0 0.0
        %2173 = vmatpush.msra.mxu0 0.0
        %2174 = vmatpush.msra.mxu0 0.0
        %2175 = vmatpush.msra.mxu0 0.0
        %2176 = vmatpush.msra.mxu0 %v1987
        %2177 = vmatmul.f32.gmra.mxu0 %v2156
        %v2178 = vpop.f32.mrf.mxu0
        %v2179 = vadd.f32 0.0, %v2178
        %2180 = vmatmul.f32.gmra.mxu0 %v2159
        %v2181 = vpop.f32.mrf.mxu0
        %v2182 = vadd.f32 0.0, %v2181
        %2183 = vdwg.mxu0
        %v2185 = vsel %vm1347, %v2006, 0
        %v2188 = vsel %vm1347, %v2007, 0
        %2190 = vmatpush.msra.mxu0 0.0
        %2191 = vmatpush.msra.mxu0 0.0
        %2192 = vmatpush.msra.mxu0 0.0
        %2193 = vmatpush.msra.mxu0 0.0
        %2194 = vmatpush.msra.mxu0 0.0
        %2195 = vmatpush.msra.mxu0 0.0
        %2196 = vmatpush.msra.mxu0 0.0
        %2197 = vmatpush.msra.mxu0 0.0
        %2198 = vmatpush.msra.mxu0 0.0
        %2199 = vmatpush.msra.mxu0 0.0
        %2200 = vmatpush.msra.mxu0 0.0
        %2201 = vmatpush.msra.mxu0 0.0
        %2202 = vmatpush.msra.mxu0 0.0
        %2203 = vmatpush.msra.mxu0 0.0
        %2204 = vmatpush.msra.mxu0 0.0
        %2205 = vmatpush.msra.mxu0 %v1990
        %2206 = vmatmul.f32.gmra.mxu0 %v2185
        %v2207 = vpop.f32.mrf.mxu0
        %v2208 = vadd.f32 0.0, %v2207
        %2209 = vmatmul.f32.gmra.mxu0 %v2188
        %v2210 = vpop.f32.mrf.mxu0
        %v2211 = vadd.f32 0.0, %v2210
        %2212 = vdwg.mxu0
        %v2214 = vsel %vm1347, %v2008, 0
        %v2217 = vsel %vm1347, %v2009, 0
        %2219 = vmatpush.msra.mxu0 0.0
        %2220 = vmatpush.msra.mxu0 0.0
        %2221 = vmatpush.msra.mxu0 0.0
        %2222 = vmatpush.msra.mxu0 0.0
        %2223 = vmatpush.msra.mxu0 0.0
        %2224 = vmatpush.msra.mxu0 0.0
        %2225 = vmatpush.msra.mxu0 0.0
        %2226 = vmatpush.msra.mxu0 0.0
        %2227 = vmatpush.msra.mxu0 0.0
        %2228 = vmatpush.msra.mxu0 0.0
        %2229 = vmatpush.msra.mxu0 0.0
        %2230 = vmatpush.msra.mxu0 0.0
        %2231 = vmatpush.msra.mxu0 0.0
        %2232 = vmatpush.msra.mxu0 0.0
        %2233 = vmatpush.msra.mxu0 0.0
        %2234 = vmatpush.msra.mxu0 %v1992
        %2235 = vmatmul.f32.gmra.mxu0 %v2214
        %v2236 = vpop.f32.mrf.mxu0
        %v2237 = vadd.f32 0.0, %v2236
        %2238 = vmatmul.f32.gmra.mxu0 %v2217
        %v2239 = vpop.f32.mrf.mxu0
        %v2240 = vadd.f32 0.0, %v2239
        %2241 = vdwg.mxu0
        %v2247 = vunpack.c.l.b16 %v1578
        %v2248 = vunpack.c.l.b16 %v1579
        %v2249 = vunpack.c.l.b16 %v1580
        %v2250 = vunpack.c.l.b16 %v1581
        %v2251 = vunpack.c.l.b16 %v1582
        %v2252 = vpack.c.b16 %v2248, %v2247
        %v2253 = vpack.c.b16 %v2250, %v2249
        %v2254 = vpack.c.b16 %v2251, %v2251
        %v2257 = vsel %vm1952, %v1547, 0
        %v2259 = vsel %vm1952, %v1549, 0
        %v2261 = vsel %vm1952, %v1551, 0
        %v2263 = vsel %vm1952, %v1553, 0
        %v2265 = vsel %vm1952, %v1555, 0
        %v2267 = vsel %vm1952, %v1557, 0
        %v2269 = vsel %vm1952, %v1559, 0
        %v2271 = vsel %vm1952, %v1561, 0
        %v2273 = vsel %vm1952, %v1563, 0
        %v2275 = vsel %vm1952, %v1565, 0
        %v2277 = vsel %vm1952, %v1567, 0
        %v2279 = vsel %vm1952, %v1569, 0
        %v2281 = vsel %vm1952, %v1571, 0
        %v2283 = vsel %vm1952, %v1573, 0
        %v2285 = vsel %vm1952, %v1575, 0
        %v2287 = vsel %vm1952, %v1577, 0
        %v2290 = vsel %vm1961, %v2254, 0
        %2292 = vmatpush.bf16.msra.mxu0 0
        %2293 = vmatpush.bf16.msra.mxu0 0
        %2294 = vmatpush.bf16.msra.mxu0 0
        %2295 = vmatpush.bf16.msra.mxu0 0
        %2296 = vmatpush.bf16.msra.mxu0 0
        %2297 = vmatpush.bf16.msra.mxu0 %v2290
        %2298 = vmatpush.bf16.msra.mxu0 %v2253
        %2299 = vmatpush.bf16.msra.mxu0 %v2252
        %2300 = vmatmul.bf16.gmra.mxu0 %v2257
        %v2301 = vpop.f32.mrf.mxu0
        %v2302 = vadd.f32 %v2034, %v2301
        %v2303 = vpop.f32.mrf.mxu0
        %v2304 = vadd.f32 %v2037, %v2303
        %2305 = vmatmul.bf16.gmra.mxu0 %v2259
        %v2306 = vpop.f32.mrf.mxu0
        %v2307 = vadd.f32 %v2034, %v2306
        %v2308 = vpop.f32.mrf.mxu0
        %v2309 = vadd.f32 %v2037, %v2308
        %2310 = vmatmul.bf16.gmra.mxu0 %v2261
        %v2311 = vpop.f32.mrf.mxu0
        %v2312 = vadd.f32 %v2063, %v2311
        %v2313 = vpop.f32.mrf.mxu0
        %v2314 = vadd.f32 %v2066, %v2313
        %2315 = vmatmul.bf16.gmra.mxu0 %v2263
        %v2316 = vpop.f32.mrf.mxu0
        %v2317 = vadd.f32 %v2063, %v2316
        %v2318 = vpop.f32.mrf.mxu0
        %v2319 = vadd.f32 %v2066, %v2318
        %2320 = vmatmul.bf16.gmra.mxu0 %v2265
        %v2321 = vpop.f32.mrf.mxu0
        %v2322 = vadd.f32 %v2092, %v2321
        %v2323 = vpop.f32.mrf.mxu0
        %v2324 = vadd.f32 %v2095, %v2323
        %2325 = vmatmul.bf16.gmra.mxu0 %v2267
        %v2326 = vpop.f32.mrf.mxu0
        %v2327 = vadd.f32 %v2092, %v2326
        %v2328 = vpop.f32.mrf.mxu0
        %v2329 = vadd.f32 %v2095, %v2328
        %2330 = vmatmul.bf16.gmra.mxu0 %v2269
        %v2331 = vpop.f32.mrf.mxu0
        %v2332 = vadd.f32 %v2121, %v2331
        %v2333 = vpop.f32.mrf.mxu0
        %v2334 = vadd.f32 %v2124, %v2333
        %2335 = vmatmul.bf16.gmra.mxu0 %v2271
        %v2336 = vpop.f32.mrf.mxu0
        %v2337 = vadd.f32 %v2121, %v2336
        %v2338 = vpop.f32.mrf.mxu0
        %v2339 = vadd.f32 %v2124, %v2338
        %2340 = vmatmul.bf16.gmra.mxu0 %v2273
        %v2341 = vpop.f32.mrf.mxu0
        %v2342 = vadd.f32 %v2150, %v2341
        %v2343 = vpop.f32.mrf.mxu0
        %v2344 = vadd.f32 %v2153, %v2343
        %2345 = vmatmul.bf16.gmra.mxu0 %v2275
        %v2346 = vpop.f32.mrf.mxu0
        %v2347 = vadd.f32 %v2150, %v2346
        %v2348 = vpop.f32.mrf.mxu0
        %v2349 = vadd.f32 %v2153, %v2348
        %2350 = vmatmul.bf16.gmra.mxu0 %v2277
        %v2351 = vpop.f32.mrf.mxu0
        %v2352 = vadd.f32 %v2179, %v2351
        %v2353 = vpop.f32.mrf.mxu0
        %v2354 = vadd.f32 %v2182, %v2353
        %2355 = vmatmul.bf16.gmra.mxu0 %v2279
        %v2356 = vpop.f32.mrf.mxu0
        %v2357 = vadd.f32 %v2179, %v2356
        %v2358 = vpop.f32.mrf.mxu0
        %v2359 = vadd.f32 %v2182, %v2358
        %2360 = vmatmul.bf16.gmra.mxu0 %v2281
        %v2361 = vpop.f32.mrf.mxu0
        %v2362 = vadd.f32 %v2208, %v2361
        %v2363 = vpop.f32.mrf.mxu0
        %v2364 = vadd.f32 %v2211, %v2363
        %2365 = vmatmul.bf16.gmra.mxu0 %v2283
        %v2366 = vpop.f32.mrf.mxu0
        %v2367 = vadd.f32 %v2208, %v2366
        %v2368 = vpop.f32.mrf.mxu0
        %v2369 = vadd.f32 %v2211, %v2368
        %2370 = vmatmul.bf16.gmra.mxu0 %v2285
        %v2371 = vpop.f32.mrf.mxu0
        %v2372 = vadd.f32 %v2237, %v2371
        %v2373 = vpop.f32.mrf.mxu0
        %v2374 = vadd.f32 %v2240, %v2373
        %2375 = vmatmul.bf16.gmra.mxu0 %v2287
        %v2376 = vpop.f32.mrf.mxu0
        %v2377 = vadd.f32 %v2237, %v2376
        %v2378 = vpop.f32.mrf.mxu0
        %v2379 = vadd.f32 %v2240, %v2378
        %2380 = vdwg.mxu0
        %v2381 = vadd.f32 %v2302, %v2304
        %v2382 = vadd.f32 %v2381, %v2307
        %v2383 = vadd.f32 %v2382, %v2309
        %v2384 = vadd.f32 %v2383, %v2312
        %v2385 = vadd.f32 %v2384, %v2314
        %v2386 = vadd.f32 %v2385, %v2317
        %v2387 = vadd.f32 %v2386, %v2319
        %v2388 = vadd.f32 %v2387, %v2322
        %v2389 = vadd.f32 %v2388, %v2324
        %v2390 = vadd.f32 %v2389, %v2327
        %v2391 = vadd.f32 %v2390, %v2329
        %v2392 = vadd.f32 %v2391, %v2332
        %v2393 = vadd.f32 %v2392, %v2334
        %v2394 = vadd.f32 %v2393, %v2337
        %v2395 = vadd.f32 %v2394, %v2339
        %v2396 = vadd.f32 %v2395, %v2342
        %v2397 = vadd.f32 %v2396, %v2344
        %v2398 = vadd.f32 %v2397, %v2347
        %v2399 = vadd.f32 %v2398, %v2349
        %v2400 = vadd.f32 %v2399, %v2352
        %v2401 = vadd.f32 %v2400, %v2354
        %v2402 = vadd.f32 %v2401, %v2357
        %v2403 = vadd.f32 %v2402, %v2359
        %v2404 = vadd.f32 %v2403, %v2362
        %v2405 = vadd.f32 %v2404, %v2364
        %v2406 = vadd.f32 %v2405, %v2367
        %v2407 = vadd.f32 %v2406, %v2369
        %v2408 = vadd.f32 %v2407, %v2372
        %v2409 = vadd.f32 %v2408, %v2374
        %v2410 = vadd.f32 %v2409, %v2377
        %v2411 = vadd.f32 %v2410, %v2379
        %v2412 = vrot.slane %v2411, 4
        %v2413 = vadd.f32 %v2411, %v2412
        %v2414 = vrot.slane %v2413, 2
        %v2415 = vadd.f32 %v2413, %v2414
        %v2416 = vrot.slane %v2415, 1
        %v2417 = vadd.f32 %v2415, %v2416
        %v2418 = vmul.f32 %v2302, %v2302
        %v2419 = vmul.f32 %v2304, %v2304
        %v2420 = vmul.f32 %v2307, %v2307
        %v2421 = vmul.f32 %v2309, %v2309
        %v2422 = vmul.f32 %v2312, %v2312
        %v2423 = vmul.f32 %v2314, %v2314
        %v2424 = vmul.f32 %v2317, %v2317
        %v2425 = vmul.f32 %v2319, %v2319
        %v2426 = vmul.f32 %v2322, %v2322
        %v2427 = vmul.f32 %v2324, %v2324
        %v2428 = vmul.f32 %v2327, %v2327
        %v2429 = vmul.f32 %v2329, %v2329
        %v2430 = vmul.f32 %v2332, %v2332
        %v2431 = vmul.f32 %v2334, %v2334
        %v2432 = vmul.f32 %v2337, %v2337
        %v2433 = vmul.f32 %v2339, %v2339
        %v2434 = vmul.f32 %v2342, %v2342
        %v2435 = vmul.f32 %v2344, %v2344
        %v2436 = vmul.f32 %v2347, %v2347
        %v2437 = vmul.f32 %v2349, %v2349
        %v2438 = vmul.f32 %v2352, %v2352
        %v2439 = vmul.f32 %v2354, %v2354
        %v2440 = vmul.f32 %v2357, %v2357
        %v2441 = vmul.f32 %v2359, %v2359
        %v2442 = vmul.f32 %v2362, %v2362
        %v2443 = vmul.f32 %v2364, %v2364
        %v2444 = vmul.f32 %v2367, %v2367
        %v2445 = vmul.f32 %v2369, %v2369
        %v2446 = vmul.f32 %v2372, %v2372
        %v2447 = vmul.f32 %v2374, %v2374
        %v2448 = vmul.f32 %v2377, %v2377
        %v2449 = vmul.f32 %v2379, %v2379
        %v2450 = vadd.f32 %v2418, %v2419
        %v2451 = vadd.f32 %v2450, %v2420
        %v2452 = vadd.f32 %v2451, %v2421
        %v2453 = vadd.f32 %v2452, %v2422
        %v2454 = vadd.f32 %v2453, %v2423
        %v2455 = vadd.f32 %v2454, %v2424
        %v2456 = vadd.f32 %v2455, %v2425
        %v2457 = vadd.f32 %v2456, %v2426
        %v2458 = vadd.f32 %v2457, %v2427
        %v2459 = vadd.f32 %v2458, %v2428
        %v2460 = vadd.f32 %v2459, %v2429
        %v2461 = vadd.f32 %v2460, %v2430
        %v2462 = vadd.f32 %v2461, %v2431
        %v2463 = vadd.f32 %v2462, %v2432
        %v2464 = vadd.f32 %v2463, %v2433
        %v2465 = vadd.f32 %v2464, %v2434
        %v2466 = vadd.f32 %v2465, %v2435
        %v2467 = vadd.f32 %v2466, %v2436
        %v2468 = vadd.f32 %v2467, %v2437
        %v2469 = vadd.f32 %v2468, %v2438
        %v2470 = vadd.f32 %v2469, %v2439
        %v2471 = vadd.f32 %v2470, %v2440
        %v2472 = vadd.f32 %v2471, %v2441
        %v2473 = vadd.f32 %v2472, %v2442
        %v2474 = vadd.f32 %v2473, %v2443
        %v2475 = vadd.f32 %v2474, %v2444
        %v2476 = vadd.f32 %v2475, %v2445
        %v2477 = vadd.f32 %v2476, %v2446
        %v2478 = vadd.f32 %v2477, %v2447
        %v2479 = vadd.f32 %v2478, %v2448
        %v2480 = vadd.f32 %v2479, %v2449
        %v2481 = vrot.slane %v2480, 4
        %v2482 = vadd.f32 %v2480, %v2481
        %v2483 = vrot.slane %v2482, 2
        %v2484 = vadd.f32 %v2482, %v2483
        %v2485 = vrot.slane %v2484, 1
        %v2486 = vadd.f32 %v2484, %v2485
        %vm2487 = vcmask 1040384
        %v2488 = vsel %vm2487, %v2417, %v2486
        %2489 = vst [vmem:[%s270] sm:$0x3] %v2488
        %v2490 = vpack.c.bf16 %v2302, %v2302
        %v2491 = vpack.c.bf16 %v2304, %v2304
        %v2492 = vpack.c.bf16 %v2307, %v2307
        %v2493 = vpack.c.bf16 %v2309, %v2309
        %v2494 = vpack.c.bf16 %v2312, %v2312
        %v2495 = vpack.c.bf16 %v2314, %v2314
        %v2496 = vpack.c.bf16 %v2317, %v2317
        %v2497 = vpack.c.bf16 %v2319, %v2319
        %v2498 = vpack.c.bf16 %v2322, %v2322
        %v2499 = vpack.c.bf16 %v2324, %v2324
        %v2500 = vpack.c.bf16 %v2327, %v2327
        %v2501 = vpack.c.bf16 %v2329, %v2329
        %v2502 = vpack.c.bf16 %v2332, %v2332
        %v2503 = vpack.c.bf16 %v2334, %v2334
        %v2504 = vpack.c.bf16 %v2337, %v2337
        %v2505 = vpack.c.bf16 %v2339, %v2339
        %v2506 = vpack.c.bf16 %v2342, %v2342
        %v2507 = vpack.c.bf16 %v2344, %v2344
        %v2508 = vpack.c.bf16 %v2347, %v2347
        %v2509 = vpack.c.bf16 %v2349, %v2349
        %v2510 = vpack.c.bf16 %v2352, %v2352
        %v2511 = vpack.c.bf16 %v2354, %v2354
        %v2512 = vpack.c.bf16 %v2357, %v2357
        %v2513 = vpack.c.bf16 %v2359, %v2359
        %v2514 = vpack.c.bf16 %v2362, %v2362
        %v2515 = vpack.c.bf16 %v2364, %v2364
        %v2516 = vpack.c.bf16 %v2367, %v2367
        %v2517 = vpack.c.bf16 %v2369, %v2369
        %v2518 = vpack.c.bf16 %v2372, %v2372
        %v2519 = vpack.c.bf16 %v2374, %v2374
        %v2520 = vpack.c.bf16 %v2377, %v2377
        %v2521 = vpack.c.bf16 %v2379, %v2379
        %2522 = vst [vmem:[%s263] sm:$0xf] %v2490
        %2523 = vst [vmem:[%s263 + $0x4] sm:$0xf] %v2491
        %2524 = vst [vmem:[%s263 + $0x8] sm:$0xf] %v2492
        %2525 = vst [vmem:[%s263 + $0xc] sm:$0xf] %v2493
        %2526 = vst [vmem:[%s263 + $0x10] sm:$0xf] %v2494
        %2527 = vst [vmem:[%s263 + $0x14] sm:$0xf] %v2495
        %2528 = vst [vmem:[%s263 + $0x18] sm:$0xf] %v2496
        %2529 = vst [vmem:[%s263 + $0x1c] sm:$0xf] %v2497
        %2530 = vst [vmem:[%s263 + $0x20] sm:$0xf] %v2498
        %2531 = vst [vmem:[%s263 + $0x24] sm:$0xf] %v2499
        %2532 = vst [vmem:[%s263 + $0x28] sm:$0xf] %v2500
        %2533 = vst [vmem:[%s263 + $0x2c] sm:$0xf] %v2501
        %2534 = vst [vmem:[%s263 + $0x30] sm:$0xf] %v2502
        %2535 = vst [vmem:[%s263 + $0x34] sm:$0xf] %v2503
        %2536 = vst [vmem:[%s263 + $0x38] sm:$0xf] %v2504
        %2537 = vst [vmem:[%s263 + $0x3c] sm:$0xf] %v2505
        %2538 = vst [vmem:[%s263 + $0x40] sm:$0xf] %v2506
        %2539 = vst [vmem:[%s263 + $0x44] sm:$0xf] %v2507
        %2540 = vst [vmem:[%s263 + $0x48] sm:$0xf] %v2508
        %2541 = vst [vmem:[%s263 + $0x4c] sm:$0xf] %v2509
        %2542 = vst [vmem:[%s263 + $0x50] sm:$0xf] %v2510
        %2543 = vst [vmem:[%s263 + $0x54] sm:$0xf] %v2511
        %2544 = vst [vmem:[%s263 + $0x58] sm:$0xf] %v2512
        %2545 = vst [vmem:[%s263 + $0x5c] sm:$0xf] %v2513
        %2546 = vst [vmem:[%s263 + $0x60] sm:$0xf] %v2514
        %2547 = vst [vmem:[%s263 + $0x64] sm:$0xf] %v2515
        %2548 = vst [vmem:[%s263 + $0x68] sm:$0xf] %v2516
        %2549 = vst [vmem:[%s263 + $0x6c] sm:$0xf] %v2517
        %2550 = vst [vmem:[%s263 + $0x70] sm:$0xf] %v2518
        %2551 = vst [vmem:[%s263 + $0x74] sm:$0xf] %v2519
        %2552 = vst [vmem:[%s263 + $0x78] sm:$0xf] %v2520
        %2553 = vst [vmem:[%s263 + $0x7c] sm:$0xf] %v2521
        %s2554 = sand.u32 %s147, 1
        %s2555 = scalar_lea.sflag [#allocation3], %s2554
        %s2556 = sand.u32 %s147, 1
        %s2557 = smul.addr %s2556, 128
        %s2558 = scalar_lea.vmem [#allocation2], %s2557
        %s2559 = sand.u32 %s173, 1
        %s2560 = scalar_lea.sflag [#allocation5], %s2559
        %s2561 = sand.u32 %s173, 1
        %s2562 = smul.addr %s2561, 2
        %s2563 = scalar_lea.vmem [#allocation4], %s2562
        // Predicated region
        $region41: #{tpu_custom_call.1} parent=39 // pred_check
          %p2564 = pneg %p157
        $region42: #{tpu_custom_call.1} parent=39 // pred_check_branch
          %2566 = sbr.rel (%p2564) target = $region44
        $region43: #{tpu_custom_call.1} parent=39 // pred_region
          %2568 = vsyncadd %s2555, 0
          %s2569 = smul.addr %s24, 32
          %s2570 = smul.addr %s2569, 4
          %s2571 = scalar_lea.hbm %s5, %s2570
          %s2572 = sshll.u32 %s2558, 4
          %s2573 = int_to_ptr.vmem [resolvable:$true] %s2572
          %s2574 = sshll.u32 %s2571, 4
          %s2575 = int_to_ptr.hbm [resolvable:$true] %s2574
          %2580 = dma.vmem_to_hbm [thread:$0]  %s2573, 2048, %s2575, %s2555, 64, 64, 4
        $region44: #{tpu_custom_call.1} parent=39 // pred_fallthru
          _
        // Predicated region
        $region45: #{tpu_custom_call.1} parent=39 // pred_check
          %p2581 = pneg %p183
        $region46: #{tpu_custom_call.1} parent=39 // pred_check_branch
          %2583 = sbr.rel (%p2581) target = $region48
        $region47: #{tpu_custom_call.1} parent=39 // pred_region
          %2585 = vsyncadd %s2560, 0
          %s2586 = smul.addr %s24, 2
          %s2587 = scalar_lea.hbm %s6, %s2586
          %s2589 = sshll.u32 %s2563, 4
          %s2590 = int_to_ptr.vmem [resolvable:$true] %s2589
          %s2591 = sshll.u32 %s2587, 4
          %s2592 = int_to_ptr.hbm [resolvable:$true] %s2591
          %2594 = dma.vmem_to_hbm [thread:$0]  %s2590, 32, %s2592, %s2560
        $region48: #{tpu_custom_call.1} parent=39 // pred_fallthru
          _
      $region40: #{tpu_custom_call.1} parent=5 // pred_fallthru
        _
      %p2595 = scmp.le.s32.totalorder 2, %s19
      // Predicated region
      $region49: #{tpu_custom_call.1} parent=5 // pred_check
        %p2596 = pneg %p2595
      $region50: #{tpu_custom_call.1} parent=5 // pred_check_branch
        %2598 = sbr.rel (%p2596) target = $region52
      $region51: #{tpu_custom_call.1} parent=5 // pred_region
        %s2599 = ssub.s32 %s19, 2
        // Predicated region
        $region53: #{tpu_custom_call.1} parent=51 // pred_check
          %p2600 = pneg %p163
        $region54: #{tpu_custom_call.1} parent=51 // pred_check_branch
          %2602 = sbr.rel (%p2600) target = $region56
        $region55: #{tpu_custom_call.1} parent=51 // pred_region
          %s2603 = sand.u32 %s148, 1
          %s2604 = scalar_lea.sflag [#allocation3], %s2603
          %s2605 = sand.u32 %s148, 1
          %s2606 = smul.addr %s2605, 128
          %s2607 = scalar_lea.vmem [#allocation2], %s2606
          %2609 = dma.done %s2604, 2048
        $region56: #{tpu_custom_call.1} parent=51 // pred_fallthru
          _
        // Predicated region
        $region57: #{tpu_custom_call.1} parent=51 // pred_check
          %p2610 = pneg %p189
        $region58: #{tpu_custom_call.1} parent=51 // pred_check_branch
          %2612 = sbr.rel (%p2610) target = $region60
        $region59: #{tpu_custom_call.1} parent=51 // pred_region
          %s2613 = sand.u32 %s174, 1
          %s2614 = scalar_lea.sflag [#allocation5], %s2613
          %s2615 = sand.u32 %s174, 1
          %s2616 = smul.addr %s2615, 2
          %s2617 = scalar_lea.vmem [#allocation4], %s2616
          %2619 = dma.done %s2614, 32
        $region60: #{tpu_custom_call.1} parent=51 // pred_fallthru
          _
      $region52: #{tpu_custom_call.1} parent=5 // pred_fallthru
        _
    $region6: #{tpu_custom_call.1} parent=1 // loop_footer
      %s23 = sadd.s32 1, %s19
    $region7: #{tpu_custom_call.1} parent=1 // loop_footer_branch
      %18 = sbr.rel target = $region3
    $region8: #{tpu_custom_call.1} parent=1 // loop_exit
      _
    %2620 = vsyncpa [#allocation3], 1
    %s2621 = scalar_lea.sflag [#allocation3], 1
    %2622 = vsyncpa %s2621, 1
    %2623 = vsyncpa [#allocation5], 1
    %s2624 = scalar_lea.sflag [#allocation5], 1
    %2625 = vsyncpa %s2624, 1

</llo_original>
